<compile_context>
chip_gen: v7x
topology: tpu7x:2x2x1
jax: 0.10.0
libtpu: 0.0.40
codegen_flags: <defaults>
</compile_context>

<pallas_src>
import functools

import jax
import jax.numpy as jnp
from jax.experimental import pallas as pl
from jax.experimental.pallas import tpu as pltpu


def _mha_kernel(q_ref, k_ref, v_ref,
                wq_ref, bq_ref, wk_ref, bk_ref, wv_ref, bv_ref,
                wo_ref, bo_ref, o_ref, *, num_heads, scale):
    f32 = jnp.float32
    dn = (((1,), (1,)), ((), ()))   # contract last dims of both operands (x @ W.T)

    x_q = q_ref[0].astype(f32)      # (TQ, E)
    x_k = k_ref[0].astype(f32)      # (Nk, E)
    x_v = v_ref[0].astype(f32)      # (Nk, E)

    # Linear projections (PyTorch layout: weight (out, in), y = x @ W.T + b).
    q = jax.lax.dot_general(x_q, wq_ref[...], dn, preferred_element_type=f32) + bq_ref[...]
    k = jax.lax.dot_general(x_k, wk_ref[...], dn, preferred_element_type=f32) + bk_ref[...]
    v = jax.lax.dot_general(x_v, wv_ref[...], dn, preferred_element_type=f32) + bv_ref[...]

    TQ, E = q.shape
    hd = E // num_heads
    wo = wo_ref[...]                # (E, E)

    acc = jnp.zeros((TQ, E), f32)
    for h in range(num_heads):      # small static unroll over heads
        sl = slice(h * hd, (h + 1) * hd)
        qh = q[:, sl] * scale       # (TQ, hd)   scale applied after bias (matches module)
        kh = k[:, sl]               # (Nk, hd)
        vh = v[:, sl]               # (Nk, hd)

        s = jax.lax.dot_general(qh, kh, dn, preferred_element_type=f32)   # (TQ, Nk)
        s_max = jnp.max(s, axis=-1, keepdims=True)
        e = jnp.exp(s - s_max)
        p = e / jnp.sum(e, axis=-1, keepdims=True)

        oh = jnp.dot(p, vh, preferred_element_type=f32)                   # (TQ, hd)
        # Fold out_proj per head: sum_h oh @ Wo[:, head_cols].T  == concat(oh) @ Wo.T
        acc = acc + jax.lax.dot_general(oh, wo[:, sl], dn, preferred_element_type=f32)

    o_ref[0] = (acc + bo_ref[...]).astype(o_ref.dtype)


def multi_head_attention_forward(query, key, value, *,
                                 wq, bq, wk, bk, wv, bv, wo, bo,
                                 num_heads, qk_scale=None):
    """query/key/value: (B, N, E); weights: (E, E) PyTorch (out,in); biases: (E,)."""
    B, Nq, E = query.shape
    Nk = key.shape[1]
    hd = E // num_heads
    scale = float(qk_scale) if qk_scale is not None else float(hd) ** -0.5

    # Query-sequence tile: lane-aligned 128-row tiles when possible, else full seq.
    TQ = 128 if (Nq % 128 == 0) else Nq
    grid = (B, Nq // TQ)

    f32 = jnp.float32
    b2 = lambda b: b.reshape(1, E).astype(f32)

    q_spec = pl.BlockSpec((1, TQ, E), lambda b, i: (b, i, 0))
    kv_spec = pl.BlockSpec((1, Nk, E), lambda b, i: (b, 0, 0))   # resident per batch
    w_spec = pl.BlockSpec((E, E), lambda b, i: (0, 0))           # weights stay resident
    bias_spec = pl.BlockSpec((1, E), lambda b, i: (0, 0))
    o_spec = pl.BlockSpec((1, TQ, E), lambda b, i: (b, i, 0))

    flops = 2 * B * (Nq * E * E + 2 * Nk * E * E + 2 * Nq * Nk * E + Nq * E * E)
    transcendentals = B * num_heads * Nq * Nk
    bytes_accessed = 4 * (B * (Nq + 2 * Nk) * E + 4 * E * E + 4 * E + B * Nq * E)

    out = pl.pallas_call(
        functools.partial(_mha_kernel, num_heads=num_heads, scale=scale),
        out_shape=jax.ShapeDtypeStruct((B, Nq, E), query.dtype),
        grid=grid,
        in_specs=[q_spec, kv_spec, kv_spec,
                  w_spec, bias_spec, w_spec, bias_spec,
                  w_spec, bias_spec, w_spec, bias_spec],
        out_specs=o_spec,
        compiler_params=pltpu.CompilerParams(
            dimension_semantics=("parallel", "parallel")),
        cost_estimate=pl.CostEstimate(flops=flops,
                                      transcendentals=transcendentals,
                                      bytes_accessed=bytes_accessed),
    )(query.astype(f32), key.astype(f32), value.astype(f32),
      wq.astype(f32), b2(bq), wk.astype(f32), b2(bk),
      wv.astype(f32), b2(bv), wo.astype(f32), b2(bo))
    return out


def _reference(query, key, value, p, *, num_heads, qk_scale=None):
    B, Nq, E = query.shape
    hd = E // num_heads
    scale = qk_scale if qk_scale is not None else hd ** -0.5

    def lin(x, w, b):
        return x @ w.T + b

    def split(x):
        return x.reshape(B, -1, num_heads, hd).transpose(0, 2, 1, 3)

    q = split(lin(query, p["wq"], p["bq"])) * scale
    k = split(lin(key, p["wk"], p["bk"]))
    v = split(lin(value, p["wv"], p["bv"]))
    s = jnp.einsum('bhid,bhjd->bhij', q, k)
    a = jax.nn.softmax(s, axis=-1)
    o = jnp.einsum('bhij,bhjd->bhid', a, v)
    o = o.transpose(0, 2, 1, 3).reshape(B, Nq, E)
    return lin(o, p["wo"], p["bo"])


if __name__ == "__main__":
    B, N, E, H = 2, 8, 32, 4            # batch=2, seq=8, embed_dim=32, num_heads=4

    root = jax.random.PRNGKey(0)
    keys = jax.random.split(root, 11)

    query = jax.random.normal(keys[0], (B, N, E), dtype=jnp.float32)
    key_in = jax.random.normal(keys[1], (B, N, E), dtype=jnp.float32)
    value = jax.random.normal(keys[2], (B, N, E), dtype=jnp.float32)

    lim = 1.0 / (E ** 0.5)               # roughly nn.Linear default init
    uw = lambda kk: jax.random.uniform(kk, (E, E), jnp.float32, -lim, lim)
    ub = lambda kk: jax.random.uniform(kk, (E,), jnp.float32, -lim, lim)
    params = dict(wq=uw(keys[3]), bq=ub(keys[4]),
                  wk=uw(keys[5]), bk=ub(keys[6]),
                  wv=uw(keys[7]), bv=ub(keys[8]),
                  wo=uw(keys[9]), bo=ub(keys[10]))

    out = multi_head_attention_forward(query, key_in, value,
                                       num_heads=H, **params)
    out = jax.block_until_ready(out)

    ref = _reference(query, key_in, value, params, num_heads=H)
    assert out.shape == ref.shape and out.dtype == ref.dtype
    assert jnp.max(jnp.abs(out - ref)) < 1e-4, "mismatch vs pure-JAX reference"

    print("KERNEL_OK")
</pallas_src>

<mosaic_0001>
module attributes {stable_mosaic.version = 11 : i64} {
  func.func @_mha_kernel(%arg0: i32, %arg1: i32, %arg2: memref<1x8x32xf32, #tpu.memory_space<vmem>>, %arg3: memref<1x8x32xf32, #tpu.memory_space<vmem>>, %arg4: memref<1x8x32xf32, #tpu.memory_space<vmem>>, %arg5: memref<32x32xf32, #tpu.memory_space<vmem>>, %arg6: memref<1x32xf32, #tpu.memory_space<vmem>>, %arg7: memref<32x32xf32, #tpu.memory_space<vmem>>, %arg8: memref<1x32xf32, #tpu.memory_space<vmem>>, %arg9: memref<32x32xf32, #tpu.memory_space<vmem>>, %arg10: memref<1x32xf32, #tpu.memory_space<vmem>>, %arg11: memref<32x32xf32, #tpu.memory_space<vmem>>, %arg12: memref<1x32xf32, #tpu.memory_space<vmem>>, %arg13: memref<1x8x32xf32, #tpu.memory_space<vmem>>) attributes {dimension_semantics = [#tpu.dimension_semantics<parallel>, #tpu.dimension_semantics<parallel>], iteration_bounds = array<i64: 2, 1>, scalar_prefetch = 0 : i64, scratch_operands = 0 : i64, tpu.core_type = #tpu.core_type<tc>, window_params = [{transform_indices = @transform_0, window_bounds = array<i64: 1, 8, 32>}, {transform_indices = @transform_1, window_bounds = array<i64: 1, 8, 32>}, {transform_indices = @transform_2, window_bounds = array<i64: 1, 8, 32>}, {pipeline_mode = #tpu.pipeline_mode<synchronous>, transform_indices = @transform_3, window_bounds = array<i64: 32, 32>}, {pipeline_mode = #tpu.pipeline_mode<synchronous>, transform_indices = @transform_4, window_bounds = array<i64: 1, 32>}, {pipeline_mode = #tpu.pipeline_mode<synchronous>, transform_indices = @transform_5, window_bounds = array<i64: 32, 32>}, {pipeline_mode = #tpu.pipeline_mode<synchronous>, transform_indices = @transform_6, window_bounds = array<i64: 1, 32>}, {pipeline_mode = #tpu.pipeline_mode<synchronous>, transform_indices = @transform_7, window_bounds = array<i64: 32, 32>}, {pipeline_mode = #tpu.pipeline_mode<synchronous>, transform_indices = @transform_8, window_bounds = array<i64: 1, 32>}, {pipeline_mode = #tpu.pipeline_mode<synchronous>, transform_indices = @transform_9, window_bounds = array<i64: 32, 32>}, {pipeline_mode = #tpu.pipeline_mode<synchronous>, transform_indices = @transform_10, window_bounds = array<i64: 1, 32>}, {transform_indices = @transform_11, window_bounds = array<i64: 1, 8, 32>}]} {
    %c0 = arith.constant 0 : index
    %c0_0 = arith.constant 0 : index
    %c0_1 = arith.constant 0 : index
    %0 = vector.load %arg2[%c0, %c0_0, %c0_1] : memref<1x8x32xf32, #tpu.memory_space<vmem>>, vector<1x8x32xf32>
    %1 = vector.shape_cast %0 : vector<1x8x32xf32> to vector<8x32xf32>
    %c0_2 = arith.constant 0 : index
    %c0_3 = arith.constant 0 : index
    %c0_4 = arith.constant 0 : index
    %2 = vector.load %arg3[%c0_2, %c0_3, %c0_4] : memref<1x8x32xf32, #tpu.memory_space<vmem>>, vector<1x8x32xf32>
    %3 = vector.shape_cast %2 : vector<1x8x32xf32> to vector<8x32xf32>
    %c0_5 = arith.constant 0 : index
    %c0_6 = arith.constant 0 : index
    %c0_7 = arith.constant 0 : index
    %4 = vector.load %arg4[%c0_5, %c0_6, %c0_7] : memref<1x8x32xf32, #tpu.memory_space<vmem>>, vector<1x8x32xf32>
    %5 = vector.shape_cast %4 : vector<1x8x32xf32> to vector<8x32xf32>
    %c0_8 = arith.constant 0 : index
    %c0_9 = arith.constant 0 : index
    %6 = vector.load %arg5[%c0_8, %c0_9] : memref<32x32xf32, #tpu.memory_space<vmem>>, vector<32x32xf32>
    %cst = arith.constant dense<0.000000e+00> : vector<8x32xf32>
    %7 = tpu.matmul %1, %6, %cst {dimension_numbers = #tpu.dot_dimension_numbers<[1], [1], [0], [0], [0, 0, 1, 0], [], []>} : vector<8x32xf32>, vector<32x32xf32>, vector<8x32xf32> -> vector<8x32xf32>
    %c0_10 = arith.constant 0 : index
    %c0_11 = arith.constant 0 : index
    %8 = vector.load %arg6[%c0_10, %c0_11] : memref<1x32xf32, #tpu.memory_space<vmem>>, vector<1x32xf32>
    %9 = vector.broadcast %8 : vector<1x32xf32> to vector<8x32xf32>
    %10 = arith.addf %7, %9 : vector<8x32xf32>
    %c0_12 = arith.constant 0 : index
    %c0_13 = arith.constant 0 : index
    %11 = vector.load %arg7[%c0_12, %c0_13] : memref<32x32xf32, #tpu.memory_space<vmem>>, vector<32x32xf32>
    %cst_14 = arith.constant dense<0.000000e+00> : vector<8x32xf32>
    %12 = tpu.matmul %3, %11, %cst_14 {dimension_numbers = #tpu.dot_dimension_numbers<[1], [1], [0], [0], [0, 0, 1, 0], [], []>} : vector<8x32xf32>, vector<32x32xf32>, vector<8x32xf32> -> vector<8x32xf32>
    %c0_15 = arith.constant 0 : index
    %c0_16 = arith.constant 0 : index
    %13 = vector.load %arg8[%c0_15, %c0_16] : memref<1x32xf32, #tpu.memory_space<vmem>>, vector<1x32xf32>
    %14 = vector.broadcast %13 : vector<1x32xf32> to vector<8x32xf32>
    %15 = arith.addf %12, %14 : vector<8x32xf32>
    %c0_17 = arith.constant 0 : index
    %c0_18 = arith.constant 0 : index
    %16 = vector.load %arg9[%c0_17, %c0_18] : memref<32x32xf32, #tpu.memory_space<vmem>>, vector<32x32xf32>
    %cst_19 = arith.constant dense<0.000000e+00> : vector<8x32xf32>
    %17 = tpu.matmul %5, %16, %cst_19 {dimension_numbers = #tpu.dot_dimension_numbers<[1], [1], [0], [0], [0, 0, 1, 0], [], []>} : vector<8x32xf32>, vector<32x32xf32>, vector<8x32xf32> -> vector<8x32xf32>
    %c0_20 = arith.constant 0 : index
    %c0_21 = arith.constant 0 : index
    %18 = vector.load %arg10[%c0_20, %c0_21] : memref<1x32xf32, #tpu.memory_space<vmem>>, vector<1x32xf32>
    %19 = vector.broadcast %18 : vector<1x32xf32> to vector<8x32xf32>
    %20 = arith.addf %17, %19 : vector<8x32xf32>
    %c0_22 = arith.constant 0 : index
    %c0_23 = arith.constant 0 : index
    %21 = vector.load %arg11[%c0_22, %c0_23] : memref<32x32xf32, #tpu.memory_space<vmem>>, vector<32x32xf32>
    %cst_24 = arith.constant 0.000000e+00 : f32
    %22 = vector.broadcast %cst_24 : f32 to vector<8x32xf32>
    %23 = vector.extract_strided_slice %10 {offsets = [0, 0], sizes = [8, 8], strides = [1, 1]} : vector<8x32xf32> to vector<8x8xf32>
    %cst_25 = arith.constant 0.353553385 : f32
    %24 = vector.broadcast %cst_25 : f32 to vector<8x8xf32>
    %25 = arith.mulf %23, %24 : vector<8x8xf32>
    %26 = vector.extract_strided_slice %15 {offsets = [0, 0], sizes = [8, 8], strides = [1, 1]} : vector<8x32xf32> to vector<8x8xf32>
    %27 = vector.extract_strided_slice %20 {offsets = [0, 0], sizes = [8, 8], strides = [1, 1]} : vector<8x32xf32> to vector<8x8xf32>
    %cst_26 = arith.constant dense<0.000000e+00> : vector<8x8xf32>
    %28 = tpu.matmul %25, %26, %cst_26 {dimension_numbers = #tpu.dot_dimension_numbers<[1], [1], [0], [0], [0, 0, 1, 0], [], []>} : vector<8x8xf32>, vector<8x8xf32>, vector<8x8xf32> -> vector<8x8xf32>
    %cst_27 = arith.constant dense<0xFF800000> : vector<8xf32>
    %29 = vector.multi_reduction <maximumf>, %28, %cst_27 [1] : vector<8x8xf32> to vector<8xf32>
    %30 = vector.shape_cast %29 : vector<8xf32> to vector<8x1xf32>
    %31 = vector.broadcast %30 : vector<8x1xf32> to vector<8x8xf32>
    %32 = arith.subf %28, %31 : vector<8x8xf32>
    %33 = math.exp %32 : vector<8x8xf32>
    %cst_28 = arith.constant dense<0.000000e+00> : vector<8xf32>
    %34 = vector.multi_reduction <add>, %33, %cst_28 [1] : vector<8x8xf32> to vector<8xf32>
    %35 = vector.shape_cast %34 : vector<8xf32> to vector<8x1xf32>
    %36 = vector.broadcast %35 : vector<8x1xf32> to vector<8x8xf32>
    %37 = arith.divf %33, %36 : vector<8x8xf32>
    %cst_29 = arith.constant dense<0.000000e+00> : vector<8x8xf32>
    %38 = tpu.matmul %37, %27, %cst_29 {dimension_numbers = #tpu.dot_dimension_numbers<[1], [0], [0], [1], [0, 0, 1, 1], [], []>} : vector<8x8xf32>, vector<8x8xf32>, vector<8x8xf32> -> vector<8x8xf32>
    %39 = vector.extract_strided_slice %21 {offsets = [0, 0], sizes = [32, 8], strides = [1, 1]} : vector<32x32xf32> to vector<32x8xf32>
    %cst_30 = arith.constant dense<0.000000e+00> : vector<8x32xf32>
    %40 = tpu.matmul %38, %39, %cst_30 {dimension_numbers = #tpu.dot_dimension_numbers<[1], [1], [0], [0], [0, 0, 1, 0], [], []>} : vector<8x8xf32>, vector<32x8xf32>, vector<8x32xf32> -> vector<8x32xf32>
    %41 = arith.addf %22, %40 : vector<8x32xf32>
    %42 = vector.extract_strided_slice %10 {offsets = [0, 8], sizes = [8, 8], strides = [1, 1]} : vector<8x32xf32> to vector<8x8xf32>
    %cst_31 = arith.constant 0.353553385 : f32
    %43 = vector.broadcast %cst_31 : f32 to vector<8x8xf32>
    %44 = arith.mulf %42, %43 : vector<8x8xf32>
    %45 = vector.extract_strided_slice %15 {offsets = [0, 8], sizes = [8, 8], strides = [1, 1]} : vector<8x32xf32> to vector<8x8xf32>
    %46 = vector.extract_strided_slice %20 {offsets = [0, 8], sizes = [8, 8], strides = [1, 1]} : vector<8x32xf32> to vector<8x8xf32>
    %cst_32 = arith.constant dense<0.000000e+00> : vector<8x8xf32>
    %47 = tpu.matmul %44, %45, %cst_32 {dimension_numbers = #tpu.dot_dimension_numbers<[1], [1], [0], [0], [0, 0, 1, 0], [], []>} : vector<8x8xf32>, vector<8x8xf32>, vector<8x8xf32> -> vector<8x8xf32>
    %cst_33 = arith.constant dense<0xFF800000> : vector<8xf32>
    %48 = vector.multi_reduction <maximumf>, %47, %cst_33 [1] : vector<8x8xf32> to vector<8xf32>
    %49 = vector.shape_cast %48 : vector<8xf32> to vector<8x1xf32>
    %50 = vector.broadcast %49 : vector<8x1xf32> to vector<8x8xf32>
    %51 = arith.subf %47, %50 : vector<8x8xf32>
    %52 = math.exp %51 : vector<8x8xf32>
    %cst_34 = arith.constant dense<0.000000e+00> : vector<8xf32>
    %53 = vector.multi_reduction <add>, %52, %cst_34 [1] : vector<8x8xf32> to vector<8xf32>
    %54 = vector.shape_cast %53 : vector<8xf32> to vector<8x1xf32>
    %55 = vector.broadcast %54 : vector<8x1xf32> to vector<8x8xf32>
    %56 = arith.divf %52, %55 : vector<8x8xf32>
    %cst_35 = arith.constant dense<0.000000e+00> : vector<8x8xf32>
    %57 = tpu.matmul %56, %46, %cst_35 {dimension_numbers = #tpu.dot_dimension_numbers<[1], [0], [0], [1], [0, 0, 1, 1], [], []>} : vector<8x8xf32>, vector<8x8xf32>, vector<8x8xf32> -> vector<8x8xf32>
    %58 = vector.extract_strided_slice %21 {offsets = [0, 8], sizes = [32, 8], strides = [1, 1]} : vector<32x32xf32> to vector<32x8xf32>
    %cst_36 = arith.constant dense<0.000000e+00> : vector<8x32xf32>
    %59 = tpu.matmul %57, %58, %cst_36 {dimension_numbers = #tpu.dot_dimension_numbers<[1], [1], [0], [0], [0, 0, 1, 0], [], []>} : vector<8x8xf32>, vector<32x8xf32>, vector<8x32xf32> -> vector<8x32xf32>
    %60 = arith.addf %41, %59 : vector<8x32xf32>
    %61 = vector.extract_strided_slice %10 {offsets = [0, 16], sizes = [8, 8], strides = [1, 1]} : vector<8x32xf32> to vector<8x8xf32>
    %cst_37 = arith.constant 0.353553385 : f32
    %62 = vector.broadcast %cst_37 : f32 to vector<8x8xf32>
    %63 = arith.mulf %61, %62 : vector<8x8xf32>
    %64 = vector.extract_strided_slice %15 {offsets = [0, 16], sizes = [8, 8], strides = [1, 1]} : vector<8x32xf32> to vector<8x8xf32>
    %65 = vector.extract_strided_slice %20 {offsets = [0, 16], sizes = [8, 8], strides = [1, 1]} : vector<8x32xf32> to vector<8x8xf32>
    %cst_38 = arith.constant dense<0.000000e+00> : vector<8x8xf32>
    %66 = tpu.matmul %63, %64, %cst_38 {dimension_numbers = #tpu.dot_dimension_numbers<[1], [1], [0], [0], [0, 0, 1, 0], [], []>} : vector<8x8xf32>, vector<8x8xf32>, vector<8x8xf32> -> vector<8x8xf32>
    %cst_39 = arith.constant dense<0xFF800000> : vector<8xf32>
    %67 = vector.multi_reduction <maximumf>, %66, %cst_39 [1] : vector<8x8xf32> to vector<8xf32>
    %68 = vector.shape_cast %67 : vector<8xf32> to vector<8x1xf32>
    %69 = vector.broadcast %68 : vector<8x1xf32> to vector<8x8xf32>
    %70 = arith.subf %66, %69 : vector<8x8xf32>
    %71 = math.exp %70 : vector<8x8xf32>
    %cst_40 = arith.constant dense<0.000000e+00> : vector<8xf32>
    %72 = vector.multi_reduction <add>, %71, %cst_40 [1] : vector<8x8xf32> to vector<8xf32>
    %73 = vector.shape_cast %72 : vector<8xf32> to vector<8x1xf32>
    %74 = vector.broadcast %73 : vector<8x1xf32> to vector<8x8xf32>
    %75 = arith.divf %71, %74 : vector<8x8xf32>
    %cst_41 = arith.constant dense<0.000000e+00> : vector<8x8xf32>
    %76 = tpu.matmul %75, %65, %cst_41 {dimension_numbers = #tpu.dot_dimension_numbers<[1], [0], [0], [1], [0, 0, 1, 1], [], []>} : vector<8x8xf32>, vector<8x8xf32>, vector<8x8xf32> -> vector<8x8xf32>
    %77 = vector.extract_strided_slice %21 {offsets = [0, 16], sizes = [32, 8], strides = [1, 1]} : vector<32x32xf32> to vector<32x8xf32>
    %cst_42 = arith.constant dense<0.000000e+00> : vector<8x32xf32>
    %78 = tpu.matmul %76, %77, %cst_42 {dimension_numbers = #tpu.dot_dimension_numbers<[1], [1], [0], [0], [0, 0, 1, 0], [], []>} : vector<8x8xf32>, vector<32x8xf32>, vector<8x32xf32> -> vector<8x32xf32>
    %79 = arith.addf %60, %78 : vector<8x32xf32>
    %80 = vector.extract_strided_slice %10 {offsets = [0, 24], sizes = [8, 8], strides = [1, 1]} : vector<8x32xf32> to vector<8x8xf32>
    %cst_43 = arith.constant 0.353553385 : f32
    %81 = vector.broadcast %cst_43 : f32 to vector<8x8xf32>
    %82 = arith.mulf %80, %81 : vector<8x8xf32>
    %83 = vector.extract_strided_slice %15 {offsets = [0, 24], sizes = [8, 8], strides = [1, 1]} : vector<8x32xf32> to vector<8x8xf32>
    %84 = vector.extract_strided_slice %20 {offsets = [0, 24], sizes = [8, 8], strides = [1, 1]} : vector<8x32xf32> to vector<8x8xf32>
    %cst_44 = arith.constant dense<0.000000e+00> : vector<8x8xf32>
    %85 = tpu.matmul %82, %83, %cst_44 {dimension_numbers = #tpu.dot_dimension_numbers<[1], [1], [0], [0], [0, 0, 1, 0], [], []>} : vector<8x8xf32>, vector<8x8xf32>, vector<8x8xf32> -> vector<8x8xf32>
    %cst_45 = arith.constant dense<0xFF800000> : vector<8xf32>
    %86 = vector.multi_reduction <maximumf>, %85, %cst_45 [1] : vector<8x8xf32> to vector<8xf32>
    %87 = vector.shape_cast %86 : vector<8xf32> to vector<8x1xf32>
    %88 = vector.broadcast %87 : vector<8x1xf32> to vector<8x8xf32>
    %89 = arith.subf %85, %88 : vector<8x8xf32>
    %90 = math.exp %89 : vector<8x8xf32>
    %cst_46 = arith.constant dense<0.000000e+00> : vector<8xf32>
    %91 = vector.multi_reduction <add>, %90, %cst_46 [1] : vector<8x8xf32> to vector<8xf32>
    %92 = vector.shape_cast %91 : vector<8xf32> to vector<8x1xf32>
    %93 = vector.broadcast %92 : vector<8x1xf32> to vector<8x8xf32>
    %94 = arith.divf %90, %93 : vector<8x8xf32>
    %cst_47 = arith.constant dense<0.000000e+00> : vector<8x8xf32>
    %95 = tpu.matmul %94, %84, %cst_47 {dimension_numbers = #tpu.dot_dimension_numbers<[1], [0], [0], [1], [0, 0, 1, 1], [], []>} : vector<8x8xf32>, vector<8x8xf32>, vector<8x8xf32> -> vector<8x8xf32>
    %96 = vector.extract_strided_slice %21 {offsets = [0, 24], sizes = [32, 8], strides = [1, 1]} : vector<32x32xf32> to vector<32x8xf32>
    %cst_48 = arith.constant dense<0.000000e+00> : vector<8x32xf32>
    %97 = tpu.matmul %95, %96, %cst_48 {dimension_numbers = #tpu.dot_dimension_numbers<[1], [1], [0], [0], [0, 0, 1, 0], [], []>} : vector<8x8xf32>, vector<32x8xf32>, vector<8x32xf32> -> vector<8x32xf32>
    %98 = arith.addf %79, %97 : vector<8x32xf32>
    %c0_49 = arith.constant 0 : index
    %c0_50 = arith.constant 0 : index
    %99 = vector.load %arg12[%c0_49, %c0_50] : memref<1x32xf32, #tpu.memory_space<vmem>>, vector<1x32xf32>
    %100 = vector.broadcast %99 : vector<1x32xf32> to vector<8x32xf32>
    %101 = arith.addf %98, %100 : vector<8x32xf32>
    %c0_51 = arith.constant 0 : index
    %c0_52 = arith.constant 0 : index
    %c0_53 = arith.constant 0 : index
    %102 = vector.load %arg13[%c0_51, %c0_52, %c0_53] : memref<1x8x32xf32, #tpu.memory_space<vmem>>, vector<1x8x32xf32>
    %103 = vector.shape_cast %102 : vector<1x8x32xf32> to vector<8x32xf32>
    %104 = vector.shape_cast %101 : vector<8x32xf32> to vector<1x8x32xf32>
    tpu.vector_store %arg13[%c0_51, %c0_52, %c0_53], %104 {strides = array<i32>} : memref<1x8x32xf32, #tpu.memory_space<vmem>>, vector<1x8x32xf32>,
    return
  }
  func.func @transform_0(%arg0: i32, %arg1: i32) -> (i32, i32, i32) {
    %c0_i32 = arith.constant 0 : i32
    %c0_i32_0 = arith.constant 0 : i32
    return %arg0, %arg1, %c0_i32 : i32, i32, i32
  }
  func.func @transform_1(%arg0: i32, %arg1: i32) -> (i32, i32, i32) {
    %c0_i32 = arith.constant 0 : i32
    %c0_i32_0 = arith.constant 0 : i32
    %c0_i32_1 = arith.constant 0 : i32
    return %arg0, %c0_i32, %c0_i32_0 : i32, i32, i32
  }
  func.func @transform_2(%arg0: i32, %arg1: i32) -> (i32, i32, i32) {
    %c0_i32 = arith.constant 0 : i32
    %c0_i32_0 = arith.constant 0 : i32
    %c0_i32_1 = arith.constant 0 : i32
    return %arg0, %c0_i32, %c0_i32_0 : i32, i32, i32
  }
  func.func @transform_3(%arg0: i32, %arg1: i32) -> (i32, i32) {
    %c0_i32 = arith.constant 0 : i32
    %c0_i32_0 = arith.constant 0 : i32
    %c0_i32_1 = arith.constant 0 : i32
    return %c0_i32, %c0_i32_0 : i32, i32
  }
  func.func @transform_4(%arg0: i32, %arg1: i32) -> (i32, i32) {
    %c0_i32 = arith.constant 0 : i32
    %c0_i32_0 = arith.constant 0 : i32
    %c0_i32_1 = arith.constant 0 : i32
    return %c0_i32, %c0_i32_0 : i32, i32
  }
  func.func @transform_5(%arg0: i32, %arg1: i32) -> (i32, i32) {
    %c0_i32 = arith.constant 0 : i32
    %c0_i32_0 = arith.constant 0 : i32
    %c0_i32_1 = arith.constant 0 : i32
    return %c0_i32, %c0_i32_0 : i32, i32
  }
  func.func @transform_6(%arg0: i32, %arg1: i32) -> (i32, i32) {
    %c0_i32 = arith.constant 0 : i32
    %c0_i32_0 = arith.constant 0 : i32
    %c0_i32_1 = arith.constant 0 : i32
    return %c0_i32, %c0_i32_0 : i32, i32
  }
  func.func @transform_7(%arg0: i32, %arg1: i32) -> (i32, i32) {
    %c0_i32 = arith.constant 0 : i32
    %c0_i32_0 = arith.constant 0 : i32
    %c0_i32_1 = arith.constant 0 : i32
    return %c0_i32, %c0_i32_0 : i32, i32
  }
  func.func @transform_8(%arg0: i32, %arg1: i32) -> (i32, i32) {
    %c0_i32 = arith.constant 0 : i32
    %c0_i32_0 = arith.constant 0 : i32
    %c0_i32_1 = arith.constant 0 : i32
    return %c0_i32, %c0_i32_0 : i32, i32
  }
  func.func @transform_9(%arg0: i32, %arg1: i32) -> (i32, i32) {
    %c0_i32 = arith.constant 0 : i32
    %c0_i32_0 = arith.constant 0 : i32
    %c0_i32_1 = arith.constant 0 : i32
    return %c0_i32, %c0_i32_0 : i32, i32
  }
  func.func @transform_10(%arg0: i32, %arg1: i32) -> (i32, i32) {
    %c0_i32 = arith.constant 0 : i32
    %c0_i32_0 = arith.constant 0 : i32
    %c0_i32_1 = arith.constant 0 : i32
    return %c0_i32, %c0_i32_0 : i32, i32
  }
  func.func @transform_11(%arg0: i32, %arg1: i32) -> (i32, i32, i32) {
    %c0_i32 = arith.constant 0 : i32
    %c0_i32_0 = arith.constant 0 : i32
    return %arg0, %arg1, %c0_i32 : i32, i32, i32
  }
}

</mosaic_0001>

<llo_original>
// kernel: tpu_custom_call.1
$region0: #{tpu_custom_call.1}
  #allocation0 [shape = 'u32[]', space=smem, size = 0x4, offset = 0x4, fixed_abs, tag = 'smem constant byte address 0x4 - core index']
  #allocation1 [shape = 'u32[144,128]{1,0:T(1,128)}', space=vmem, size = 0x12000, scoped, tag = 'internal scratch']
  %s0 = inlined_call_operand.hbm [shape: f32[2,8,32], index: 0, kind: input, shape index: {}]
  %s1 = inlined_call_operand.hbm [shape: f32[2,8,32], index: 1, kind: input, shape index: {}]
  %s2 = inlined_call_operand.hbm [shape: f32[2,8,32], index: 2, kind: input, shape index: {}]
  %s3 = inlined_call_operand.hbm [shape: f32[32,32], index: 3, kind: input, shape index: {}]
  %s4 = inlined_call_operand.vmem [shape: f32[1,32], index: 4, kind: input, shape index: {}]
  %s5 = inlined_call_operand.hbm [shape: f32[32,32], index: 5, kind: input, shape index: {}]
  %s6 = inlined_call_operand.vmem [shape: f32[1,32], index: 6, kind: input, shape index: {}]
  %s7 = inlined_call_operand.hbm [shape: f32[32,32], index: 7, kind: input, shape index: {}]
  %s8 = inlined_call_operand.hbm [shape: f32[1,32], index: 8, kind: input, shape index: {}]
  %s9 = inlined_call_operand.vmem [shape: f32[32,32], index: 9, kind: input, shape index: {}]
  %s10 = inlined_call_operand.vmem [shape: f32[1,32], index: 10, kind: input, shape index: {}]
  %s11 = inlined_call_operand.hbm [shape: f32[2,8,32], index: 11, kind: output, shape index: {}]
  %s12 = sld [smem:[#allocation0]]
  $region105: #{tpu_custom_call.1} parent=0
    _
  %s14 = ssub.s32 1, %s12
  %s15 = scalar_select 0, %s14, %s12
  $region1: #{tpu_custom_call.1} parent=0
    #allocation2 [shape = 'u8[8192]{0}', space=vmem, size = 0x2000, scoped, tag = 'input window, operand 0']
    #allocation3 [shape = 's32[2]{0}', space=sflag, size = 0x8, scoped, tag = 'scoped memory for tpu_custom_call.1']
    #allocation4 [shape = 's32[2]{0}', space=sflag, size = 0x8, scoped, tag = 'scoped memory for tpu_custom_call.1']
    #allocation5 [shape = 'u8[8192]{0}', space=vmem, size = 0x2000, scoped, tag = 'input window, operand 1']
    #allocation6 [shape = 's32[2]{0}', space=sflag, size = 0x8, scoped, tag = 'scoped memory for tpu_custom_call.1']
    #allocation7 [shape = 'u8[8192]{0}', space=vmem, size = 0x2000, scoped, tag = 'input window, operand 2']
    #allocation8 [shape = 'u8[16384]{0}', space=vmem, size = 0x4000, scoped, tag = 'input window, operand 3, single buffered']
    #allocation9 [shape = 's32[1]{0}', space=sflag, size = 0x4, scoped, tag = 'scoped memory for tpu_custom_call.1']
    #allocation10 [shape = 'u8[16384]{0}', space=vmem, size = 0x4000, scoped, tag = 'input window, operand 5, single buffered']
    #allocation11 [shape = 'u8[16384]{0}', space=vmem, size = 0x4000, scoped, tag = 'input window, operand 7, single buffered']
    #allocation12 [shape = 's32[1]{0}', space=sflag, size = 0x4, scoped, tag = 'scoped memory for tpu_custom_call.1']
    #allocation13 [shape = 'u8[512]{0}', space=vmem, size = 0x400, scoped, tag = 'input window, operand 8, single buffered']
    #allocation14 [shape = 'u8[8192]{0}', space=vmem, size = 0x2000, scoped, tag = 'output window, operand 0']
    %16 = vsyncpa [#allocation3], 0
    %s17 = scalar_lea.sflag [#allocation3], 1
    %18 = vsyncpa %s17, 0
    %19 = vsyncpa [#allocation6], 0
    %s20 = scalar_lea.sflag [#allocation6], 1
    %21 = vsyncpa %s20, 0
    %22 = vsyncpa [#allocation9], 0
    %23 = vsyncpa [#allocation12], 0
    %24 = vsyncpa [#allocation4], 0
    %s25 = scalar_lea.sflag [#allocation4], 1
    %26 = vsyncpa %s25, 0
    loop: start=0, step=1, limit=4
    $region2: #{tpu_custom_call.1} parent=1 // loop_pre_header
      _
    $region3: #{tpu_custom_call.1} parent=1 // loop_header
      %s28 = sphi 0, %s32
      %p29 = scmp.ge.s32.totalorder %s28, 4
      %s35 = sphi 0, %s47
      %s36 = sphi 0, %s43
      %s37 = sphi 0, %s35
      %s38 = sphi 0, %s36
      %s39 = sphi 0, %s37
      %s40 = sphi 0, %s38
      %s52 = sphi 0, %s54
      %s55 = sphi 0, %s52
      %s56 = sphi 0, %s55
      %s72 = sphi 0, %s56
      %s78 = sphi 0, %s80
      %s81 = sphi 0, %s78
      %s82 = sphi 0, %s81
      %s98 = sphi 0, %s82
      %s104 = sphi 0, %s106
      %s107 = sphi 0, %s104
      %s108 = sphi 0, %s107
      %s124 = sphi 0, %s108
      %s128 = sphi 0, %s128
      %s130 = sphi 0, %s128
      %s131 = sphi 0, %s130
      %s145 = sphi 0, %s131
      %s149 = sphi 0, %s149
      %s151 = sphi 0, %s149
      %s152 = sphi 0, %s151
      %s166 = sphi 0, %s152
      %s170 = sphi 0, %s170
      %s172 = sphi 0, %s170
      %s173 = sphi 0, %s172
      %s187 = sphi 0, %s173
      %s191 = sphi 0, %s191
      %s193 = sphi 0, %s191
      %s194 = sphi 0, %s193
      %s208 = sphi 0, %s194
      %s212 = sphi 0, %s212
      %s214 = sphi 0, %s212
      %s215 = sphi 0, %s214
      %s229 = sphi 0, %s215
      %s233 = sphi 0, %s233
      %s235 = sphi 0, %s233
      %s236 = sphi 0, %s235
      %s250 = sphi 0, %s236
      %s254 = sphi 0, %s254
      %s256 = sphi 0, %s254
      %s257 = sphi 0, %s256
      %s271 = sphi 0, %s257
      %s275 = sphi 0, %s275
      %s277 = sphi 0, %s275
      %s278 = sphi 0, %s277
      %s292 = sphi 0, %s278
      %s300 = sphi 0, %s302
      %s303 = sphi 0, %s300
      %s304 = sphi 0, %s303
      %s320 = sphi 0, %s304
    $region4: #{tpu_custom_call.1} parent=1 // loop_header_branch
      %31 = sbr.rel (%p29) target = $region8
    $region5: #{tpu_custom_call.1} parent=1 // loop_body
      %s33 = ssub.s32 %s28, 1
      %s34 = ssub.s32 %s28, 2
      %s41 = sadd.s32 1, %s36
      %p42 = scmp.ge.s32.totalorder %s41, 1
      %s43 = scalar_select %p42, 0, %s41
      %s44 = sadd.s32 1, %s35
      %s45 = scalar_select %p42, %s44, %s35
      %p46 = scmp.ge.s32.totalorder %s45, 2
      %s47 = scalar_select %p46, 0, %s45
      %s48 = ssub.s32 %s35, %s47
      %s49 = ssub.s32 %s36, %s43
      %s50 = sor.u32 %s48, %s49
      %p51 = scmp.eq.s32.totalorder %s50, 0
      %s53 = sadd.s32 %s52, 1
      %s54 = scalar_select %p51, %s52, %s53
      %p57 = pneg %p51
      %p58 = scmp.eq.s32.totalorder %s28, 1
      %p59 = por %p57, %p58
      %p60 = scmp.ne.s32.totalorder %s52, %s55
      %p61 = scmp.eq.s32.totalorder %s28, 0
      %p62 = por %p60, %p61
      %p63 = scmp.ne.s32.totalorder %s52, %s55
      %p64 = scmp.eq.s32.totalorder %s33, 1
      %p65 = por %p63, %p64
      %p66 = scmp.ne.s32.totalorder %s55, %s56
      %p67 = scmp.eq.s32.totalorder %s33, 0
      %p68 = por %p66, %p67
      %p69 = scmp.ne.s32.totalorder %s55, %s56
      %p70 = scmp.eq.s32.totalorder %s34, 1
      %p71 = por %p69, %p70
      %p73 = scmp.ne.s32.totalorder %s56, %s72
      %p74 = scmp.eq.s32.totalorder %s34, 0
      %p75 = por %p73, %p74
      %s76 = ssub.s32 %s35, %s47
      %p77 = scmp.eq.s32.totalorder %s76, 0
      %s79 = sadd.s32 %s78, 1
      %s80 = scalar_select %p77, %s78, %s79
      %p83 = pneg %p77
      %p84 = scmp.eq.s32.totalorder %s28, 1
      %p85 = por %p83, %p84
      %p86 = scmp.ne.s32.totalorder %s78, %s81
      %p87 = scmp.eq.s32.totalorder %s28, 0
      %p88 = por %p86, %p87
      %p89 = scmp.ne.s32.totalorder %s78, %s81
      %p90 = scmp.eq.s32.totalorder %s33, 1
      %p91 = por %p89, %p90
      %p92 = scmp.ne.s32.totalorder %s81, %s82
      %p93 = scmp.eq.s32.totalorder %s33, 0
      %p94 = por %p92, %p93
      %p95 = scmp.ne.s32.totalorder %s81, %s82
      %p96 = scmp.eq.s32.totalorder %s34, 1
      %p97 = por %p95, %p96
      %p99 = scmp.ne.s32.totalorder %s82, %s98
      %p100 = scmp.eq.s32.totalorder %s34, 0
      %p101 = por %p99, %p100
      %s102 = ssub.s32 %s35, %s47
      %p103 = scmp.eq.s32.totalorder %s102, 0
      %s105 = sadd.s32 %s104, 1
      %s106 = scalar_select %p103, %s104, %s105
      %p109 = pneg %p103
      %p110 = scmp.eq.s32.totalorder %s28, 1
      %p111 = por %p109, %p110
      %p112 = scmp.ne.s32.totalorder %s104, %s107
      %p113 = scmp.eq.s32.totalorder %s28, 0
      %p114 = por %p112, %p113
      %p115 = scmp.ne.s32.totalorder %s104, %s107
      %p116 = scmp.eq.s32.totalorder %s33, 1
      %p117 = por %p115, %p116
      %p118 = scmp.ne.s32.totalorder %s107, %s108
      %p119 = scmp.eq.s32.totalorder %s33, 0
      %p120 = por %p118, %p119
      %p121 = scmp.ne.s32.totalorder %s107, %s108
      %p122 = scmp.eq.s32.totalorder %s34, 1
      %p123 = por %p121, %p122
      %p125 = scmp.ne.s32.totalorder %s108, %s124
      %p126 = scmp.eq.s32.totalorder %s34, 0
      %p127 = por %p125, %p126
      %s129 = sadd.s32 %s128, 1
      %p132 = scmp.eq.s32.totalorder %s28, 1
      %p133 = scmp.ne.s32.totalorder %s128, %s130
      %p134 = scmp.eq.s32.totalorder %s28, 0
      %p135 = por %p133, %p134
      %p136 = scmp.ne.s32.totalorder %s128, %s130
      %p137 = scmp.eq.s32.totalorder %s33, 1
      %p138 = por %p136, %p137
      %p139 = scmp.ne.s32.totalorder %s130, %s131
      %p140 = scmp.eq.s32.totalorder %s33, 0
      %p141 = por %p139, %p140
      %p142 = scmp.ne.s32.totalorder %s130, %s131
      %p143 = scmp.eq.s32.totalorder %s34, 1
      %p144 = por %p142, %p143
      %p146 = scmp.ne.s32.totalorder %s131, %s145
      %p147 = scmp.eq.s32.totalorder %s34, 0
      %p148 = por %p146, %p147
      %s150 = sadd.s32 %s149, 1
      %p153 = scmp.eq.s32.totalorder %s28, 1
      %p154 = scmp.ne.s32.totalorder %s149, %s151
      %p155 = scmp.eq.s32.totalorder %s28, 0
      %p156 = por %p154, %p155
      %p157 = scmp.ne.s32.totalorder %s149, %s151
      %p158 = scmp.eq.s32.totalorder %s33, 1
      %p159 = por %p157, %p158
      %p160 = scmp.ne.s32.totalorder %s151, %s152
      %p161 = scmp.eq.s32.totalorder %s33, 0
      %p162 = por %p160, %p161
      %p163 = scmp.ne.s32.totalorder %s151, %s152
      %p164 = scmp.eq.s32.totalorder %s34, 1
      %p165 = por %p163, %p164
      %p167 = scmp.ne.s32.totalorder %s152, %s166
      %p168 = scmp.eq.s32.totalorder %s34, 0
      %p169 = por %p167, %p168
      %s171 = sadd.s32 %s170, 1
      %p174 = scmp.eq.s32.totalorder %s28, 1
      %p175 = scmp.ne.s32.totalorder %s170, %s172
      %p176 = scmp.eq.s32.totalorder %s28, 0
      %p177 = por %p175, %p176
      %p178 = scmp.ne.s32.totalorder %s170, %s172
      %p179 = scmp.eq.s32.totalorder %s33, 1
      %p180 = por %p178, %p179
      %p181 = scmp.ne.s32.totalorder %s172, %s173
      %p182 = scmp.eq.s32.totalorder %s33, 0
      %p183 = por %p181, %p182
      %p184 = scmp.ne.s32.totalorder %s172, %s173
      %p185 = scmp.eq.s32.totalorder %s34, 1
      %p186 = por %p184, %p185
      %p188 = scmp.ne.s32.totalorder %s173, %s187
      %p189 = scmp.eq.s32.totalorder %s34, 0
      %p190 = por %p188, %p189
      %s192 = sadd.s32 %s191, 1
      %p195 = scmp.eq.s32.totalorder %s28, 1
      %p196 = scmp.ne.s32.totalorder %s191, %s193
      %p197 = scmp.eq.s32.totalorder %s28, 0
      %p198 = por %p196, %p197
      %p199 = scmp.ne.s32.totalorder %s191, %s193
      %p200 = scmp.eq.s32.totalorder %s33, 1
      %p201 = por %p199, %p200
      %p202 = scmp.ne.s32.totalorder %s193, %s194
      %p203 = scmp.eq.s32.totalorder %s33, 0
      %p204 = por %p202, %p203
      %p205 = scmp.ne.s32.totalorder %s193, %s194
      %p206 = scmp.eq.s32.totalorder %s34, 1
      %p207 = por %p205, %p206
      %p209 = scmp.ne.s32.totalorder %s194, %s208
      %p210 = scmp.eq.s32.totalorder %s34, 0
      %p211 = por %p209, %p210
      %s213 = sadd.s32 %s212, 1
      %p216 = scmp.eq.s32.totalorder %s28, 1
      %p217 = scmp.ne.s32.totalorder %s212, %s214
      %p218 = scmp.eq.s32.totalorder %s28, 0
      %p219 = por %p217, %p218
      %p220 = scmp.ne.s32.totalorder %s212, %s214
      %p221 = scmp.eq.s32.totalorder %s33, 1
      %p222 = por %p220, %p221
      %p223 = scmp.ne.s32.totalorder %s214, %s215
      %p224 = scmp.eq.s32.totalorder %s33, 0
      %p225 = por %p223, %p224
      %p226 = scmp.ne.s32.totalorder %s214, %s215
      %p227 = scmp.eq.s32.totalorder %s34, 1
      %p228 = por %p226, %p227
      %p230 = scmp.ne.s32.totalorder %s215, %s229
      %p231 = scmp.eq.s32.totalorder %s34, 0
      %p232 = por %p230, %p231
      %s234 = sadd.s32 %s233, 1
      %p237 = scmp.eq.s32.totalorder %s28, 1
      %p238 = scmp.ne.s32.totalorder %s233, %s235
      %p239 = scmp.eq.s32.totalorder %s28, 0
      %p240 = por %p238, %p239
      %p241 = scmp.ne.s32.totalorder %s233, %s235
      %p242 = scmp.eq.s32.totalorder %s33, 1
      %p243 = por %p241, %p242
      %p244 = scmp.ne.s32.totalorder %s235, %s236
      %p245 = scmp.eq.s32.totalorder %s33, 0
      %p246 = por %p244, %p245
      %p247 = scmp.ne.s32.totalorder %s235, %s236
      %p248 = scmp.eq.s32.totalorder %s34, 1
      %p249 = por %p247, %p248
      %p251 = scmp.ne.s32.totalorder %s236, %s250
      %p252 = scmp.eq.s32.totalorder %s34, 0
      %p253 = por %p251, %p252
      %s255 = sadd.s32 %s254, 1
      %p258 = scmp.eq.s32.totalorder %s28, 1
      %p259 = scmp.ne.s32.totalorder %s254, %s256
      %p260 = scmp.eq.s32.totalorder %s28, 0
      %p261 = por %p259, %p260
      %p262 = scmp.ne.s32.totalorder %s254, %s256
      %p263 = scmp.eq.s32.totalorder %s33, 1
      %p264 = por %p262, %p263
      %p265 = scmp.ne.s32.totalorder %s256, %s257
      %p266 = scmp.eq.s32.totalorder %s33, 0
      %p267 = por %p265, %p266
      %p268 = scmp.ne.s32.totalorder %s256, %s257
      %p269 = scmp.eq.s32.totalorder %s34, 1
      %p270 = por %p268, %p269
      %p272 = scmp.ne.s32.totalorder %s257, %s271
      %p273 = scmp.eq.s32.totalorder %s34, 0
      %p274 = por %p272, %p273
      %s276 = sadd.s32 %s275, 1
      %p279 = scmp.eq.s32.totalorder %s28, 1
      %p280 = scmp.ne.s32.totalorder %s275, %s277
      %p281 = scmp.eq.s32.totalorder %s28, 0
      %p282 = por %p280, %p281
      %p283 = scmp.ne.s32.totalorder %s275, %s277
      %p284 = scmp.eq.s32.totalorder %s33, 1
      %p285 = por %p283, %p284
      %p286 = scmp.ne.s32.totalorder %s277, %s278
      %p287 = scmp.eq.s32.totalorder %s33, 0
      %p288 = por %p286, %p287
      %p289 = scmp.ne.s32.totalorder %s277, %s278
      %p290 = scmp.eq.s32.totalorder %s34, 1
      %p291 = por %p289, %p290
      %p293 = scmp.ne.s32.totalorder %s278, %s292
      %p294 = scmp.eq.s32.totalorder %s34, 0
      %p295 = por %p293, %p294
      %s296 = ssub.s32 %s35, %s47
      %s297 = ssub.s32 %s36, %s43
      %s298 = sor.u32 %s296, %s297
      %p299 = scmp.eq.s32.totalorder %s298, 0
      %s301 = sadd.s32 %s300, 1
      %s302 = scalar_select %p299, %s300, %s301
      %p305 = pneg %p299
      %p306 = scmp.eq.s32.totalorder %s28, 1
      %p307 = por %p305, %p306
      %p308 = scmp.ne.s32.totalorder %s300, %s303
      %p309 = scmp.eq.s32.totalorder %s28, 0
      %p310 = por %p308, %p309
      %p311 = scmp.ne.s32.totalorder %s300, %s303
      %p312 = scmp.eq.s32.totalorder %s33, 1
      %p313 = por %p311, %p312
      %p314 = scmp.ne.s32.totalorder %s303, %s304
      %p315 = scmp.eq.s32.totalorder %s33, 0
      %p316 = por %p314, %p315
      %p317 = scmp.ne.s32.totalorder %s303, %s304
      %p318 = scmp.eq.s32.totalorder %s34, 1
      %p319 = por %p317, %p318
      %p321 = scmp.ne.s32.totalorder %s304, %s320
      %p322 = scmp.eq.s32.totalorder %s34, 0
      %p323 = por %p321, %p322
      %p324 = scmp.le.s32.totalorder 1, %s28
      %p325 = scmp.lt.s32.totalorder %s28, 3
      %p326 = pnand %p324, %p325
      %p327 = pneg %p326
      // Predicated region
      $region9: #{tpu_custom_call.1} parent=5 // pred_check
        _
      $region10: #{tpu_custom_call.1} parent=5 // pred_check_branch
        %329 = sbr.rel (%p326) target = $region12
      $region11: #{tpu_custom_call.1} parent=5 // pred_region
        %s330 = ssub.s32 %s28, 1
        // Predicated region
        $region13: #{tpu_custom_call.1} parent=11 // pred_check
          %p331 = pneg %p141
        $region14: #{tpu_custom_call.1} parent=11 // pred_check_branch
          %333 = sbr.rel (%p331) target = $region16
        $region15: #{tpu_custom_call.1} parent=11 // pred_region
          %s335 = ssub.s32 512, 512
          %336 = vsyncadd [#allocation9], %s335
          %s337 = sshll.u32 [#allocation8], 4
          %s338 = int_to_ptr.vmem [resolvable:$true] %s337
          %343 = dma.hbm_to_vmem [thread:$0]  %s3, 512, %s338, [#allocation9], 128, 128, 8
        $region16: #{tpu_custom_call.1} parent=11 // pred_fallthru
          _
        // Predicated region
        $region17: #{tpu_custom_call.1} parent=11 // pred_check
          %p344 = pneg %p162
        $region18: #{tpu_custom_call.1} parent=11 // pred_check_branch
          %346 = sbr.rel (%p344) target = $region20
        $region19: #{tpu_custom_call.1} parent=11 // pred_region
          _
        $region20: #{tpu_custom_call.1} parent=11 // pred_fallthru
          _
        // Predicated region
        $region21: #{tpu_custom_call.1} parent=11 // pred_check
          %p347 = pneg %p183
        $region22: #{tpu_custom_call.1} parent=11 // pred_check_branch
          %349 = sbr.rel (%p347) target = $region24
        $region23: #{tpu_custom_call.1} parent=11 // pred_region
          %s351 = ssub.s32 512, 512
          %352 = vsyncadd [#allocation9], %s351
          %s353 = sshll.u32 [#allocation10], 4
          %s354 = int_to_ptr.vmem [resolvable:$true] %s353
          %359 = dma.hbm_to_vmem [thread:$0]  %s5, 512, %s354, [#allocation9], 128, 128, 8
        $region24: #{tpu_custom_call.1} parent=11 // pred_fallthru
          _
        // Predicated region
        $region25: #{tpu_custom_call.1} parent=11 // pred_check
          %p360 = pneg %p204
        $region26: #{tpu_custom_call.1} parent=11 // pred_check_branch
          %362 = sbr.rel (%p360) target = $region28
        $region27: #{tpu_custom_call.1} parent=11 // pred_region
          _
        $region28: #{tpu_custom_call.1} parent=11 // pred_fallthru
          _
        // Predicated region
        $region29: #{tpu_custom_call.1} parent=11 // pred_check
          %p363 = pneg %p225
        $region30: #{tpu_custom_call.1} parent=11 // pred_check_branch
          %365 = sbr.rel (%p363) target = $region32
        $region31: #{tpu_custom_call.1} parent=11 // pred_region
          %s367 = ssub.s32 512, 512
          %368 = vsyncadd [#allocation12], %s367
          %s369 = sshll.u32 [#allocation11], 4
          %s370 = int_to_ptr.vmem [resolvable:$true] %s369
          %375 = dma.hbm_to_vmem [thread:$0]  %s7, 512, %s370, [#allocation12], 128, 128, 8
        $region32: #{tpu_custom_call.1} parent=11 // pred_fallthru
          _
        // Predicated region
        $region33: #{tpu_custom_call.1} parent=11 // pred_check
          %p376 = pneg %p246
        $region34: #{tpu_custom_call.1} parent=11 // pred_check_branch
          %378 = sbr.rel (%p376) target = $region36
        $region35: #{tpu_custom_call.1} parent=11 // pred_region
          %s380 = ssub.s32 16, 16
          %381 = vsyncadd [#allocation12], %s380
          %s383 = sshll.u32 [#allocation13], 4
          %s384 = int_to_ptr.vmem [resolvable:$true] %s383
          %386 = dma.hbm_to_vmem [thread:$0]  %s8, 16, %s384, [#allocation12]
        $region36: #{tpu_custom_call.1} parent=11 // pred_fallthru
          _
        // Predicated region
        $region37: #{tpu_custom_call.1} parent=11 // pred_check
          %p387 = pneg %p267
        $region38: #{tpu_custom_call.1} parent=11 // pred_check_branch
          %389 = sbr.rel (%p387) target = $region40
        $region39: #{tpu_custom_call.1} parent=11 // pred_region
          _
        $region40: #{tpu_custom_call.1} parent=11 // pred_fallthru
          _
        // Predicated region
        $region41: #{tpu_custom_call.1} parent=11 // pred_check
          %p390 = pneg %p288
        $region42: #{tpu_custom_call.1} parent=11 // pred_check_branch
          %392 = sbr.rel (%p390) target = $region44
        $region43: #{tpu_custom_call.1} parent=11 // pred_region
          _
        $region44: #{tpu_custom_call.1} parent=11 // pred_fallthru
          _
      $region12: #{tpu_custom_call.1} parent=5 // pred_fallthru
        _
      %p393 = scmp.lt.s32.totalorder %s28, 2
      // Predicated region
      $region45: #{tpu_custom_call.1} parent=5 // pred_check
        %p394 = pneg %p393
      $region46: #{tpu_custom_call.1} parent=5 // pred_check_branch
        %396 = sbr.rel (%p394) target = $region48
      $region47: #{tpu_custom_call.1} parent=5 // pred_region
        // Predicated region
        $region49: #{tpu_custom_call.1} parent=47 // pred_check
          %p397 = pneg %p62
        $region50: #{tpu_custom_call.1} parent=47 // pred_check_branch
          %399 = sbr.rel (%p397) target = $region52
        $region51: #{tpu_custom_call.1} parent=47 // pred_region
          %s400 = sand.u32 %s52, 1
          %s401 = scalar_lea.sflag [#allocation3], %s400
          %s402 = sand.u32 %s52, 1
          %s403 = smul.addr %s402, 8
          %s404 = scalar_lea.vmem [#allocation2], %s403
          %s406 = ssub.s32 128, 128
          %407 = vsyncadd %s401, %s406
          %s408 = sadd.s32 %s36, %s35
          %s409 = smul.addr %s408, 128
          %s410 = scalar_lea.hbm %s0, %s409
          %s412 = sshll.u32 %s404, 4
          %s413 = int_to_ptr.vmem [resolvable:$true] %s412
          %415 = dma.hbm_to_vmem [thread:$0]  %s410, 128, %s413, %s401
        $region52: #{tpu_custom_call.1} parent=47 // pred_fallthru
          _
        // Predicated region
        $region53: #{tpu_custom_call.1} parent=47 // pred_check
          %p416 = pneg %p88
        $region54: #{tpu_custom_call.1} parent=47 // pred_check_branch
          %418 = sbr.rel (%p416) target = $region56
        $region55: #{tpu_custom_call.1} parent=47 // pred_region
          %s419 = sand.u32 %s28, 1
          %s420 = scalar_lea.sflag [#allocation6], %s419
          %s421 = sand.u32 %s78, 1
          %s422 = smul.addr %s421, 8
          %s423 = scalar_lea.vmem [#allocation5], %s422
          %s425 = ssub.s32 128, 128
          %426 = vsyncadd %s420, %s425
          %s427 = smul.addr %s35, 128
          %s428 = scalar_lea.hbm %s1, %s427
          %s430 = sshll.u32 %s423, 4
          %s431 = int_to_ptr.vmem [resolvable:$true] %s430
          %433 = dma.hbm_to_vmem [thread:$0]  %s428, 128, %s431, %s420
        $region56: #{tpu_custom_call.1} parent=47 // pred_fallthru
          _
        // Predicated region
        $region57: #{tpu_custom_call.1} parent=47 // pred_check
          %p434 = pneg %p114
        $region58: #{tpu_custom_call.1} parent=47 // pred_check_branch
          %436 = sbr.rel (%p434) target = $region60
        $region59: #{tpu_custom_call.1} parent=47 // pred_region
          %s437 = sand.u32 %s28, 1
          %s438 = scalar_lea.sflag [#allocation6], %s437
          %s439 = sand.u32 %s104, 1
          %s440 = smul.addr %s439, 8
          %s441 = scalar_lea.vmem [#allocation7], %s440
          %s443 = ssub.s32 128, 128
          %444 = vsyncadd %s438, %s443
          %s445 = smul.addr %s35, 128
          %s446 = scalar_lea.hbm %s2, %s445
          %s448 = sshll.u32 %s441, 4
          %s449 = int_to_ptr.vmem [resolvable:$true] %s448
          %451 = dma.hbm_to_vmem [thread:$0]  %s446, 128, %s449, %s438
        $region60: #{tpu_custom_call.1} parent=47 // pred_fallthru
          _
      $region48: #{tpu_custom_call.1} parent=5 // pred_fallthru
        _
      %p452 = scmp.le.s32.totalorder 1, %s28
      %p453 = scmp.lt.s32.totalorder %s28, 3
      %p454 = pnand %p452, %p453
      %p455 = pneg %p454
      // Predicated region
      $region61: #{tpu_custom_call.1} parent=5 // pred_check
        _
      $region62: #{tpu_custom_call.1} parent=5 // pred_check_branch
        %457 = sbr.rel (%p454) target = $region64
      $region63: #{tpu_custom_call.1} parent=5 // pred_region
        %s458 = ssub.s32 %s28, 1
        %s459 = sand.u32 %s55, 1
        %s460 = scalar_lea.sflag [#allocation3], %s459
        %s461 = sand.u32 %s55, 1
        %s462 = smul.addr %s461, 8
        %s463 = scalar_lea.vmem [#allocation2], %s462
        // Predicated region
        $region65: #{tpu_custom_call.1} parent=63 // pred_check
          %p464 = pneg %p68
        $region66: #{tpu_custom_call.1} parent=63 // pred_check_branch
          %466 = sbr.rel (%p464) target = $region68
        $region67: #{tpu_custom_call.1} parent=63 // pred_region
          %467 = dma.done %s460, 128
        $region68: #{tpu_custom_call.1} parent=63 // pred_fallthru
          _
        %s468 = sand.u32 %s33, 1
        %s469 = scalar_lea.sflag [#allocation6], %s468
        %s470 = sand.u32 %s81, 1
        %s471 = smul.addr %s470, 8
        %s472 = scalar_lea.vmem [#allocation5], %s471
        // Predicated region
        $region69: #{tpu_custom_call.1} parent=63 // pred_check
          %p473 = pneg %p94
        $region70: #{tpu_custom_call.1} parent=63 // pred_check_branch
          %475 = sbr.rel (%p473) target = $region72
        $region71: #{tpu_custom_call.1} parent=63 // pred_region
          %476 = dma.done %s469, 128
        $region72: #{tpu_custom_call.1} parent=63 // pred_fallthru
          _
        %s477 = sand.u32 %s33, 1
        %s478 = scalar_lea.sflag [#allocation6], %s477
        %s479 = sand.u32 %s107, 1
        %s480 = smul.addr %s479, 8
        %s481 = scalar_lea.vmem [#allocation7], %s480
        // Predicated region
        $region73: #{tpu_custom_call.1} parent=63 // pred_check
          %p482 = pneg %p120
        $region74: #{tpu_custom_call.1} parent=63 // pred_check_branch
          %484 = sbr.rel (%p482) target = $region76
        $region75: #{tpu_custom_call.1} parent=63 // pred_region
          %485 = dma.done %s478, 128
        $region76: #{tpu_custom_call.1} parent=63 // pred_fallthru
          _
        // Predicated region
        $region77: #{tpu_custom_call.1} parent=63 // pred_check
          %p486 = pneg %p141
        $region78: #{tpu_custom_call.1} parent=63 // pred_check_branch
          %488 = sbr.rel (%p486) target = $region80
        $region79: #{tpu_custom_call.1} parent=63 // pred_region
          %489 = dma.done [#allocation9], 512
        $region80: #{tpu_custom_call.1} parent=63 // pred_fallthru
          _
        // Predicated region
        $region81: #{tpu_custom_call.1} parent=63 // pred_check
          %p490 = pneg %p183
        $region82: #{tpu_custom_call.1} parent=63 // pred_check_branch
          %492 = sbr.rel (%p490) target = $region84
        $region83: #{tpu_custom_call.1} parent=63 // pred_region
          %493 = dma.done [#allocation9], 512
        $region84: #{tpu_custom_call.1} parent=63 // pred_fallthru
          _
        // Predicated region
        $region85: #{tpu_custom_call.1} parent=63 // pred_check
          %p494 = pneg %p225
        $region86: #{tpu_custom_call.1} parent=63 // pred_check_branch
          %496 = sbr.rel (%p494) target = $region88
        $region87: #{tpu_custom_call.1} parent=63 // pred_region
          %497 = dma.done [#allocation12], 512
        $region88: #{tpu_custom_call.1} parent=63 // pred_fallthru
          _
        // Predicated region
        $region89: #{tpu_custom_call.1} parent=63 // pred_check
          %p498 = pneg %p246
        $region90: #{tpu_custom_call.1} parent=63 // pred_check_branch
          %500 = sbr.rel (%p498) target = $region92
        $region91: #{tpu_custom_call.1} parent=63 // pred_region
          %501 = dma.done [#allocation12], 16
        $region92: #{tpu_custom_call.1} parent=63 // pred_fallthru
          _
        %s502 = sand.u32 %s55, 1
        %s503 = scalar_lea.sflag [#allocation3], %s502
        %s504 = sand.u32 %s55, 1
        %s505 = smul.addr %s504, 8
        %s506 = scalar_lea.vmem [#allocation2], %s505
        %p507 = pneg %p68
        %p508 = pneg %p65
        %s509 = sand.u32 %s33, 1
        %s510 = scalar_lea.sflag [#allocation6], %s509
        %s511 = sand.u32 %s81, 1
        %s512 = smul.addr %s511, 8
        %s513 = scalar_lea.vmem [#allocation5], %s512
        %p514 = pneg %p94
        %p515 = pneg %p91
        %s516 = sand.u32 %s33, 1
        %s517 = scalar_lea.sflag [#allocation6], %s516
        %s518 = sand.u32 %s107, 1
        %s519 = smul.addr %s518, 8
        %s520 = scalar_lea.vmem [#allocation7], %s519
        %p521 = pneg %p120
        %p522 = pneg %p117
        %p523 = pneg %p141
        %p524 = pneg %p138
        %p525 = pneg %p162
        %p526 = pneg %p159
        %p527 = pneg %p183
        %p528 = pneg %p180
        %p529 = pneg %p204
        %p530 = pneg %p201
        %p531 = pneg %p225
        %p532 = pneg %p222
        %p533 = pneg %p246
        %p534 = pneg %p243
        %p535 = pneg %p267
        %p536 = pneg %p264
        %p537 = pneg %p288
        %p538 = pneg %p285
        %p539 = pneg %p316
        %p540 = pneg %p313
        %s541 = sand.u32 %s303, 1
        %s542 = scalar_lea.sflag [#allocation4], %s541
        %s543 = sand.u32 %s303, 1
        %s544 = smul.addr %s543, 8
        %s545 = scalar_lea.vmem [#allocation14], %s544
        %v546 = vld [vmem:[%s463] sm:$0xff]
        %v547 = vld [vmem:[%s472] sm:$0xff]
        %v548 = vld [vmem:[%s481] sm:$0xff]
        %v549 = vld [vmem:[#allocation8] sm:$0xff]
        %v550 = vld [vmem:[#allocation8 + $0x8] sm:$0xff]
        %v551 = vld [vmem:[#allocation8 + $0x10] sm:$0xff]
        %v552 = vld [vmem:[#allocation8 + $0x18] sm:$0xff]
        %v553 = vld [vmem:[%s4] sm:$0x1]
        %v555 = vlaneseq
        %v556 = vshrl.u32 %v555, 7
        %v557 = vsub.s32 0, %v556
        %v558 = vrot.slane %v553, %v557
        %vm560 = vcmask 261120
        %v562 = vsel %vm560, %v546, 0
        %v565 = vsel %vm560, %v549, 0
        %v568 = vsel %vm560, %v550, 0
        %v571 = vsel %vm560, %v551, 0
        %v574 = vsel %vm560, %v552, 0
        %576 = vmatprep.subr.mxu0 0.0
        %577 = vmatpush1.xpose.msra.mxu0 %v565
        %578 = vmatprep.subr.mxu0 0.0
        %579 = vmatpush1.xpose.msra.mxu0 %v568
        %580 = vmatprep.subr.mxu0 0.0
        %581 = vmatpush1.xpose.msra.mxu0 %v571
        %582 = vmatprep.subr.mxu0 0.0
        %583 = vmatpush1.xpose.msra.mxu0 %v574
        %584 = vmatprep.subr.mxu0 0.0
        %585 = vmatpush1.xpose.msra.mxu0 0.0
        %586 = vmatprep.subr.mxu0 0.0
        %587 = vmatpush1.xpose.msra.mxu0 0.0
        %588 = vmatprep.subr.mxu0 0.0
        %589 = vmatpush1.xpose.msra.mxu0 0.0
        %590 = vmatprep.subr.mxu0 0.0
        %591 = vmatpush1.xpose.msra.mxu0 0.0
        %592 = vmatprep.subr.mxu0 0.0
        %593 = vmatpush1.xpose.msra.mxu0 0.0
        %594 = vmatprep.subr.mxu0 0.0
        %595 = vmatpush1.xpose.msra.mxu0 0.0
        %596 = vmatprep.subr.mxu0 0.0
        %597 = vmatpush1.xpose.msra.mxu0 0.0
        %598 = vmatprep.subr.mxu0 0.0
        %599 = vmatpush1.xpose.msra.mxu0 0.0
        %600 = vmatprep.subr.mxu0 0.0
        %601 = vmatpush1.xpose.msra.mxu0 0.0
        %602 = vmatprep.subr.mxu0 0.0
        %603 = vmatpush1.xpose.msra.mxu0 0.0
        %604 = vmatprep.subr.mxu0 0.0
        %605 = vmatpush1.xpose.msra.mxu0 0.0
        %606 = vmatprep.subr.mxu0 0.0
        %607 = vmatpush1.xpose.msra.mxu0 0.0
        %608 = vmatprep.subr.mxu0 0.0
        %609 = vmatpush1.xpose.msra.mxu0 0.0
        %610 = vmatprep.subr.mxu0 0.0
        %611 = vmatpush1.xpose.msra.mxu0 0.0
        %612 = vmatprep.subr.mxu0 0.0
        %613 = vmatpush1.xpose.msra.mxu0 0.0
        %614 = vmatprep.subr.mxu0 0.0
        %615 = vmatpush1.xpose.msra.mxu0 0.0
        %616 = vmatprep.subr.mxu0 0.0
        %617 = vmatpush1.xpose.msra.mxu0 0.0
        %618 = vmatprep.subr.mxu0 0.0
        %619 = vmatpush1.xpose.msra.mxu0 0.0
        %620 = vmatprep.subr.mxu0 0.0
        %621 = vmatpush1.xpose.msra.mxu0 0.0
        %622 = vmatprep.subr.mxu0 0.0
        %623 = vmatpush1.xpose.msra.mxu0 0.0
        %624 = vmatprep.subr.mxu0 0.0
        %625 = vmatpush1.xpose.msra.mxu0 0.0
        %626 = vmatprep.subr.mxu0 0.0
        %627 = vmatpush1.xpose.msra.mxu0 0.0
        %628 = vmatprep.subr.mxu0 0.0
        %629 = vmatpush1.xpose.msra.mxu0 0.0
        %630 = vmatprep.subr.mxu0 0.0
        %631 = vmatpush1.xpose.msra.mxu0 0.0
        %632 = vmatprep.subr.mxu0 0.0
        %633 = vmatpush1.xpose.msra.mxu0 0.0
        %634 = vmatprep.subr.mxu0 0.0
        %635 = vmatpush1.xpose.msra.mxu0 0.0
        %636 = vmatprep.subr.mxu0 0.0
        %637 = vmatpush1.xpose.msra.mxu0 0.0
        %638 = vmatprep.subr.mxu0 0.0
        %639 = vmatpush1.xpose.msra.mxu0 0.0
        %640 = vmatprep.mubr.f32.mxu0 0.0
        %641 = vmatmul.mubr.f32.gmra.mrb[0].mxu0 %v562
        %v642 = vpop.f32.mrb[0].mxu0
        %v643 = vadd.f32 %v558, %v642
        %v644 = vpop.f32.mrb[0].mxu0
        %645 = vdwg.mxu0
        %v646 = vld [vmem:[#allocation10] sm:$0xff]
        %v647 = vld [vmem:[#allocation10 + $0x8] sm:$0xff]
        %v648 = vld [vmem:[#allocation10 + $0x10] sm:$0xff]
        %v649 = vld [vmem:[#allocation10 + $0x18] sm:$0xff]
        %v650 = vld [vmem:[%s6] sm:$0x1]
        %v652 = vlaneseq
        %v653 = vshrl.u32 %v652, 7
        %v654 = vsub.s32 0, %v653
        %v655 = vrot.slane %v650, %v654
        %v658 = vsel %vm560, %v547, 0
        %v661 = vsel %vm560, %v646, 0
        %v664 = vsel %vm560, %v647, 0
        %v667 = vsel %vm560, %v648, 0
        %v670 = vsel %vm560, %v649, 0
        %672 = vmatprep.subr.mxu0 0.0
        %673 = vmatpush1.xpose.msra.mxu0 %v661
        %674 = vmatprep.subr.mxu0 0.0
        %675 = vmatpush1.xpose.msra.mxu0 %v664
        %676 = vmatprep.subr.mxu0 0.0
        %677 = vmatpush1.xpose.msra.mxu0 %v667
        %678 = vmatprep.subr.mxu0 0.0
        %679 = vmatpush1.xpose.msra.mxu0 %v670
        %680 = vmatprep.subr.mxu0 0.0
        %681 = vmatpush1.xpose.msra.mxu0 0.0
        %682 = vmatprep.subr.mxu0 0.0
        %683 = vmatpush1.xpose.msra.mxu0 0.0
        %684 = vmatprep.subr.mxu0 0.0
        %685 = vmatpush1.xpose.msra.mxu0 0.0
        %686 = vmatprep.subr.mxu0 0.0
        %687 = vmatpush1.xpose.msra.mxu0 0.0
        %688 = vmatprep.subr.mxu0 0.0
        %689 = vmatpush1.xpose.msra.mxu0 0.0
        %690 = vmatprep.subr.mxu0 0.0
        %691 = vmatpush1.xpose.msra.mxu0 0.0
        %692 = vmatprep.subr.mxu0 0.0
        %693 = vmatpush1.xpose.msra.mxu0 0.0
        %694 = vmatprep.subr.mxu0 0.0
        %695 = vmatpush1.xpose.msra.mxu0 0.0
        %696 = vmatprep.subr.mxu0 0.0
        %697 = vmatpush1.xpose.msra.mxu0 0.0
        %698 = vmatprep.subr.mxu0 0.0
        %699 = vmatpush1.xpose.msra.mxu0 0.0
        %700 = vmatprep.subr.mxu0 0.0
        %701 = vmatpush1.xpose.msra.mxu0 0.0
        %702 = vmatprep.subr.mxu0 0.0
        %703 = vmatpush1.xpose.msra.mxu0 0.0
        %704 = vmatprep.subr.mxu0 0.0
        %705 = vmatpush1.xpose.msra.mxu0 0.0
        %706 = vmatprep.subr.mxu0 0.0
        %707 = vmatpush1.xpose.msra.mxu0 0.0
        %708 = vmatprep.subr.mxu0 0.0
        %709 = vmatpush1.xpose.msra.mxu0 0.0
        %710 = vmatprep.subr.mxu0 0.0
        %711 = vmatpush1.xpose.msra.mxu0 0.0
        %712 = vmatprep.subr.mxu0 0.0
        %713 = vmatpush1.xpose.msra.mxu0 0.0
        %714 = vmatprep.subr.mxu0 0.0
        %715 = vmatpush1.xpose.msra.mxu0 0.0
        %716 = vmatprep.subr.mxu0 0.0
        %717 = vmatpush1.xpose.msra.mxu0 0.0
        %718 = vmatprep.subr.mxu0 0.0
        %719 = vmatpush1.xpose.msra.mxu0 0.0
        %720 = vmatprep.subr.mxu0 0.0
        %721 = vmatpush1.xpose.msra.mxu0 0.0
        %722 = vmatprep.subr.mxu0 0.0
        %723 = vmatpush1.xpose.msra.mxu0 0.0
        %724 = vmatprep.subr.mxu0 0.0
        %725 = vmatpush1.xpose.msra.mxu0 0.0
        %726 = vmatprep.subr.mxu0 0.0
        %727 = vmatpush1.xpose.msra.mxu0 0.0
        %728 = vmatprep.subr.mxu0 0.0
        %729 = vmatpush1.xpose.msra.mxu0 0.0
        %730 = vmatprep.subr.mxu0 0.0
        %731 = vmatpush1.xpose.msra.mxu0 0.0
        %732 = vmatprep.subr.mxu0 0.0
        %733 = vmatpush1.xpose.msra.mxu0 0.0
        %734 = vmatprep.subr.mxu0 0.0
        %735 = vmatpush1.xpose.msra.mxu0 0.0
        %736 = vmatprep.mubr.f32.mxu0 0.0
        %737 = vmatmul.mubr.f32.gmra.mrb[0].mxu0 %v658
        %v738 = vpop.f32.mrb[0].mxu0
        %v739 = vadd.f32 %v655, %v738
        %v740 = vpop.f32.mrb[0].mxu0
        %741 = vdwg.mxu0
        %v742 = vld [vmem:[#allocation11] sm:$0xff]
        %v743 = vld [vmem:[#allocation11 + $0x8] sm:$0xff]
        %v744 = vld [vmem:[#allocation11 + $0x10] sm:$0xff]
        %v745 = vld [vmem:[#allocation11 + $0x18] sm:$0xff]
        %v746 = vld [vmem:[#allocation13] sm:$0x1]
        %v748 = vlaneseq
        %v749 = vshrl.u32 %v748, 7
        %v750 = vsub.s32 0, %v749
        %v751 = vrot.slane %v746, %v750
        %v754 = vsel %vm560, %v548, 0
        %v757 = vsel %vm560, %v742, 0
        %v760 = vsel %vm560, %v743, 0
        %v763 = vsel %vm560, %v744, 0
        %v766 = vsel %vm560, %v745, 0
        %768 = vmatprep.subr.mxu0 0.0
        %769 = vmatpush1.xpose.msra.mxu0 %v757
        %770 = vmatprep.subr.mxu0 0.0
        %771 = vmatpush1.xpose.msra.mxu0 %v760
        %772 = vmatprep.subr.mxu0 0.0
        %773 = vmatpush1.xpose.msra.mxu0 %v763
        %774 = vmatprep.subr.mxu0 0.0
        %775 = vmatpush1.xpose.msra.mxu0 %v766
        %776 = vmatprep.subr.mxu0 0.0
        %777 = vmatpush1.xpose.msra.mxu0 0.0
        %778 = vmatprep.subr.mxu0 0.0
        %779 = vmatpush1.xpose.msra.mxu0 0.0
        %780 = vmatprep.subr.mxu0 0.0
        %781 = vmatpush1.xpose.msra.mxu0 0.0
        %782 = vmatprep.subr.mxu0 0.0
        %783 = vmatpush1.xpose.msra.mxu0 0.0
        %784 = vmatprep.subr.mxu0 0.0
        %785 = vmatpush1.xpose.msra.mxu0 0.0
        %786 = vmatprep.subr.mxu0 0.0
        %787 = vmatpush1.xpose.msra.mxu0 0.0
        %788 = vmatprep.subr.mxu0 0.0
        %789 = vmatpush1.xpose.msra.mxu0 0.0
        %790 = vmatprep.subr.mxu0 0.0
        %791 = vmatpush1.xpose.msra.mxu0 0.0
        %792 = vmatprep.subr.mxu0 0.0
        %793 = vmatpush1.xpose.msra.mxu0 0.0
        %794 = vmatprep.subr.mxu0 0.0
        %795 = vmatpush1.xpose.msra.mxu0 0.0
        %796 = vmatprep.subr.mxu0 0.0
        %797 = vmatpush1.xpose.msra.mxu0 0.0
        %798 = vmatprep.subr.mxu0 0.0
        %799 = vmatpush1.xpose.msra.mxu0 0.0
        %800 = vmatprep.subr.mxu0 0.0
        %801 = vmatpush1.xpose.msra.mxu0 0.0
        %802 = vmatprep.subr.mxu0 0.0
        %803 = vmatpush1.xpose.msra.mxu0 0.0
        %804 = vmatprep.subr.mxu0 0.0
        %805 = vmatpush1.xpose.msra.mxu0 0.0
        %806 = vmatprep.subr.mxu0 0.0
        %807 = vmatpush1.xpose.msra.mxu0 0.0
        %808 = vmatprep.subr.mxu0 0.0
        %809 = vmatpush1.xpose.msra.mxu0 0.0
        %810 = vmatprep.subr.mxu0 0.0
        %811 = vmatpush1.xpose.msra.mxu0 0.0
        %812 = vmatprep.subr.mxu0 0.0
        %813 = vmatpush1.xpose.msra.mxu0 0.0
        %814 = vmatprep.subr.mxu0 0.0
        %815 = vmatpush1.xpose.msra.mxu0 0.0
        %816 = vmatprep.subr.mxu0 0.0
        %817 = vmatpush1.xpose.msra.mxu0 0.0
        %818 = vmatprep.subr.mxu0 0.0
        %819 = vmatpush1.xpose.msra.mxu0 0.0
        %820 = vmatprep.subr.mxu0 0.0
        %821 = vmatpush1.xpose.msra.mxu0 0.0
        %822 = vmatprep.subr.mxu0 0.0
        %823 = vmatpush1.xpose.msra.mxu0 0.0
        %824 = vmatprep.subr.mxu0 0.0
        %825 = vmatpush1.xpose.msra.mxu0 0.0
        %826 = vmatprep.subr.mxu0 0.0
        %827 = vmatpush1.xpose.msra.mxu0 0.0
        %828 = vmatprep.subr.mxu0 0.0
        %829 = vmatpush1.xpose.msra.mxu0 0.0
        %830 = vmatprep.subr.mxu0 0.0
        %831 = vmatpush1.xpose.msra.mxu0 0.0
        %832 = vmatprep.mubr.f32.mxu0 0.0
        %833 = vmatmul.mubr.f32.gmra.mrb[0].mxu0 %v754
        %v834 = vpop.f32.mrb[0].mxu0
        %v835 = vadd.f32 %v751, %v834
        %v836 = vpop.f32.mrb[0].mxu0
        %837 = vdwg.mxu0
        %v838 = vld [vmem:[%s9] sm:$0xff]
        %v839 = vld [vmem:[%s9 + $0x8] sm:$0xff]
        %v840 = vld [vmem:[%s9 + $0x10] sm:$0xff]
        %v841 = vld [vmem:[%s9 + $0x18] sm:$0xff]
        %v842 = vmul.f32 %v643, 0.35355338
        %vm843 = vcmask 64512
        %v845 = vsel %vm843, %v842, 0
        %v848 = vsel %vm843, %v739, 0
        %850 = vmatprep.subr.mxu0 0.0
        %851 = vmatpush1.xpose.msra.mxu0 %v848
        %852 = vmatprep.subr.mxu0 0.0
        %853 = vmatpush1.xpose.msra.mxu0 0.0
        %854 = vmatprep.subr.mxu0 0.0
        %855 = vmatpush1.xpose.msra.mxu0 0.0
        %856 = vmatprep.subr.mxu0 0.0
        %857 = vmatpush1.xpose.msra.mxu0 0.0
        %858 = vmatprep.subr.mxu0 0.0
        %859 = vmatpush1.xpose.msra.mxu0 0.0
        %860 = vmatprep.subr.mxu0 0.0
        %861 = vmatpush1.xpose.msra.mxu0 0.0
        %862 = vmatprep.subr.mxu0 0.0
        %863 = vmatpush1.xpose.msra.mxu0 0.0
        %864 = vmatprep.subr.mxu0 0.0
        %865 = vmatpush1.xpose.msra.mxu0 0.0
        %866 = vmatprep.subr.mxu0 0.0
        %867 = vmatpush1.xpose.msra.mxu0 0.0
        %868 = vmatprep.subr.mxu0 0.0
        %869 = vmatpush1.xpose.msra.mxu0 0.0
        %870 = vmatprep.subr.mxu0 0.0
        %871 = vmatpush1.xpose.msra.mxu0 0.0
        %872 = vmatprep.subr.mxu0 0.0
        %873 = vmatpush1.xpose.msra.mxu0 0.0
        %874 = vmatprep.subr.mxu0 0.0
        %875 = vmatpush1.xpose.msra.mxu0 0.0
        %876 = vmatprep.subr.mxu0 0.0
        %877 = vmatpush1.xpose.msra.mxu0 0.0
        %878 = vmatprep.subr.mxu0 0.0
        %879 = vmatpush1.xpose.msra.mxu0 0.0
        %880 = vmatprep.subr.mxu0 0.0
        %881 = vmatpush1.xpose.msra.mxu0 0.0
        %882 = vmatprep.subr.mxu0 0.0
        %883 = vmatpush1.xpose.msra.mxu0 0.0
        %884 = vmatprep.subr.mxu0 0.0
        %885 = vmatpush1.xpose.msra.mxu0 0.0
        %886 = vmatprep.subr.mxu0 0.0
        %887 = vmatpush1.xpose.msra.mxu0 0.0
        %888 = vmatprep.subr.mxu0 0.0
        %889 = vmatpush1.xpose.msra.mxu0 0.0
        %890 = vmatprep.subr.mxu0 0.0
        %891 = vmatpush1.xpose.msra.mxu0 0.0
        %892 = vmatprep.subr.mxu0 0.0
        %893 = vmatpush1.xpose.msra.mxu0 0.0
        %894 = vmatprep.subr.mxu0 0.0
        %895 = vmatpush1.xpose.msra.mxu0 0.0
        %896 = vmatprep.subr.mxu0 0.0
        %897 = vmatpush1.xpose.msra.mxu0 0.0
        %898 = vmatprep.subr.mxu0 0.0
        %899 = vmatpush1.xpose.msra.mxu0 0.0
        %900 = vmatprep.subr.mxu0 0.0
        %901 = vmatpush1.xpose.msra.mxu0 0.0
        %902 = vmatprep.subr.mxu0 0.0
        %903 = vmatpush1.xpose.msra.mxu0 0.0
        %904 = vmatprep.subr.mxu0 0.0
        %905 = vmatpush1.xpose.msra.mxu0 0.0
        %906 = vmatprep.subr.mxu0 0.0
        %907 = vmatpush1.xpose.msra.mxu0 0.0
        %908 = vmatprep.subr.mxu0 0.0
        %909 = vmatpush1.xpose.msra.mxu0 0.0
        %910 = vmatprep.subr.mxu0 0.0
        %911 = vmatpush1.xpose.msra.mxu0 0.0
        %912 = vmatprep.subr.mxu0 0.0
        %913 = vmatpush1.xpose.msra.mxu0 0.0
        %914 = vmatprep.mubr.f32.mxu0 0.0
        %915 = vmatmul.mubr.f32.gmra.mrb[0].mxu0 %v845
        %v916 = vpop.f32.mrb[0].mxu0
        %v917 = vadd.f32 0.0, %v916
        %v918 = vpop.f32.mrb[0].mxu0
        %919 = vdwg.mxu0
        %v920 = vsel %vm843, %v917, -inf
        %921 = vmax.xlane.f32.xlu0 %v920
        %v922 = vpop.xlane.xlu0 %921
        %v923 = vsub.f32 %v917, %v922
        %v924 = vmul.f32 %v923, 1.442695
        %v925 = vpow.pop %v924
        %v926 = vsel %vm843, %v925, 0.0
        %927 = vadd.xlane.f32.xlu0 %v926
        %v928 = vpop.xlane.xlu0 %927
        %v929 = vrcp.pop %v928
        %v930 = vmul.f32 %v925, %v929
        %v932 = vsel %vm843, %v930, 0
        %934 = vmatprep.subr.mxu0 0.0
        %935 = vmatpush1.msra.mxu0 %v835
        %936 = vmatprep.subr.mxu0 0.0
        %937 = vmatpush1.msra.mxu0 0.0
        %938 = vmatprep.subr.mxu0 0.0
        %939 = vmatpush1.msra.mxu0 0.0
        %940 = vmatprep.subr.mxu0 0.0
        %941 = vmatpush1.msra.mxu0 0.0
        %942 = vmatprep.subr.mxu0 0.0
        %943 = vmatpush1.msra.mxu0 0.0
        %944 = vmatprep.subr.mxu0 0.0
        %945 = vmatpush1.msra.mxu0 0.0
        %946 = vmatprep.subr.mxu0 0.0
        %947 = vmatpush1.msra.mxu0 0.0
        %948 = vmatprep.subr.mxu0 0.0
        %949 = vmatpush1.msra.mxu0 0.0
        %950 = vmatprep.subr.mxu0 0.0
        %951 = vmatpush1.msra.mxu0 0.0
        %952 = vmatprep.subr.mxu0 0.0
        %953 = vmatpush1.msra.mxu0 0.0
        %954 = vmatprep.subr.mxu0 0.0
        %955 = vmatpush1.msra.mxu0 0.0
        %956 = vmatprep.subr.mxu0 0.0
        %957 = vmatpush1.msra.mxu0 0.0
        %958 = vmatprep.subr.mxu0 0.0
        %959 = vmatpush1.msra.mxu0 0.0
        %960 = vmatprep.subr.mxu0 0.0
        %961 = vmatpush1.msra.mxu0 0.0
        %962 = vmatprep.subr.mxu0 0.0
        %963 = vmatpush1.msra.mxu0 0.0
        %964 = vmatprep.subr.mxu0 0.0
        %965 = vmatpush1.msra.mxu0 0.0
        %966 = vmatprep.subr.mxu0 0.0
        %967 = vmatpush1.msra.mxu0 0.0
        %968 = vmatprep.subr.mxu0 0.0
        %969 = vmatpush1.msra.mxu0 0.0
        %970 = vmatprep.subr.mxu0 0.0
        %971 = vmatpush1.msra.mxu0 0.0
        %972 = vmatprep.subr.mxu0 0.0
        %973 = vmatpush1.msra.mxu0 0.0
        %974 = vmatprep.subr.mxu0 0.0
        %975 = vmatpush1.msra.mxu0 0.0
        %976 = vmatprep.subr.mxu0 0.0
        %977 = vmatpush1.msra.mxu0 0.0
        %978 = vmatprep.subr.mxu0 0.0
        %979 = vmatpush1.msra.mxu0 0.0
        %980 = vmatprep.subr.mxu0 0.0
        %981 = vmatpush1.msra.mxu0 0.0
        %982 = vmatprep.subr.mxu0 0.0
        %983 = vmatpush1.msra.mxu0 0.0
        %984 = vmatprep.subr.mxu0 0.0
        %985 = vmatpush1.msra.mxu0 0.0
        %986 = vmatprep.subr.mxu0 0.0
        %987 = vmatpush1.msra.mxu0 0.0
        %988 = vmatprep.subr.mxu0 0.0
        %989 = vmatpush1.msra.mxu0 0.0
        %990 = vmatprep.subr.mxu0 0.0
        %991 = vmatpush1.msra.mxu0 0.0
        %992 = vmatprep.subr.mxu0 0.0
        %993 = vmatpush1.msra.mxu0 0.0
        %994 = vmatprep.subr.mxu0 0.0
        %995 = vmatpush1.msra.mxu0 0.0
        %996 = vmatprep.subr.mxu0 0.0
        %997 = vmatpush1.msra.mxu0 0.0
        %998 = vmatprep.mubr.f32.mxu0 0.0
        %999 = vmatmul.mubr.f32.gmra.mrb[0].mxu0 %v932
        %v1000 = vpop.f32.mrb[0].mxu0
        %v1001 = vadd.f32 0.0, %v1000
        %v1002 = vpop.f32.mrb[0].mxu0
        %1003 = vdwg.mxu0
        %1004 = vrot.lane.b32.xlu0 %v842, 120
        %v1005 = vpop.permute.xlu0 %1004
        %1006 = vrot.lane.b32.xlu0 %v739, 120
        %v1007 = vpop.permute.xlu0 %1006
        %v1008 = vsel %vm843, %v1005, 0
        %v1010 = vsel %vm843, %v1007, 0
        %1012 = vmatprep.subr.mxu0 0.0
        %1013 = vmatpush1.xpose.msra.mxu0 %v1010
        %1014 = vmatprep.subr.mxu0 0.0
        %1015 = vmatpush1.xpose.msra.mxu0 0.0
        %1016 = vmatprep.subr.mxu0 0.0
        %1017 = vmatpush1.xpose.msra.mxu0 0.0
        %1018 = vmatprep.subr.mxu0 0.0
        %1019 = vmatpush1.xpose.msra.mxu0 0.0
        %1020 = vmatprep.subr.mxu0 0.0
        %1021 = vmatpush1.xpose.msra.mxu0 0.0
        %1022 = vmatprep.subr.mxu0 0.0
        %1023 = vmatpush1.xpose.msra.mxu0 0.0
        %1024 = vmatprep.subr.mxu0 0.0
        %1025 = vmatpush1.xpose.msra.mxu0 0.0
        %1026 = vmatprep.subr.mxu0 0.0
        %1027 = vmatpush1.xpose.msra.mxu0 0.0
        %1028 = vmatprep.subr.mxu0 0.0
        %1029 = vmatpush1.xpose.msra.mxu0 0.0
        %1030 = vmatprep.subr.mxu0 0.0
        %1031 = vmatpush1.xpose.msra.mxu0 0.0
        %1032 = vmatprep.subr.mxu0 0.0
        %1033 = vmatpush1.xpose.msra.mxu0 0.0
        %1034 = vmatprep.subr.mxu0 0.0
        %1035 = vmatpush1.xpose.msra.mxu0 0.0
        %1036 = vmatprep.subr.mxu0 0.0
        %1037 = vmatpush1.xpose.msra.mxu0 0.0
        %1038 = vmatprep.subr.mxu0 0.0
        %1039 = vmatpush1.xpose.msra.mxu0 0.0
        %1040 = vmatprep.subr.mxu0 0.0
        %1041 = vmatpush1.xpose.msra.mxu0 0.0
        %1042 = vmatprep.subr.mxu0 0.0
        %1043 = vmatpush1.xpose.msra.mxu0 0.0
        %1044 = vmatprep.subr.mxu0 0.0
        %1045 = vmatpush1.xpose.msra.mxu0 0.0
        %1046 = vmatprep.subr.mxu0 0.0
        %1047 = vmatpush1.xpose.msra.mxu0 0.0
        %1048 = vmatprep.subr.mxu0 0.0
        %1049 = vmatpush1.xpose.msra.mxu0 0.0
        %1050 = vmatprep.subr.mxu0 0.0
        %1051 = vmatpush1.xpose.msra.mxu0 0.0
        %1052 = vmatprep.subr.mxu0 0.0
        %1053 = vmatpush1.xpose.msra.mxu0 0.0
        %1054 = vmatprep.subr.mxu0 0.0
        %1055 = vmatpush1.xpose.msra.mxu0 0.0
        %1056 = vmatprep.subr.mxu0 0.0
        %1057 = vmatpush1.xpose.msra.mxu0 0.0
        %1058 = vmatprep.subr.mxu0 0.0
        %1059 = vmatpush1.xpose.msra.mxu0 0.0
        %1060 = vmatprep.subr.mxu0 0.0
        %1061 = vmatpush1.xpose.msra.mxu0 0.0
        %1062 = vmatprep.subr.mxu0 0.0
        %1063 = vmatpush1.xpose.msra.mxu0 0.0
        %1064 = vmatprep.subr.mxu0 0.0
        %1065 = vmatpush1.xpose.msra.mxu0 0.0
        %1066 = vmatprep.subr.mxu0 0.0
        %1067 = vmatpush1.xpose.msra.mxu0 0.0
        %1068 = vmatprep.subr.mxu0 0.0
        %1069 = vmatpush1.xpose.msra.mxu0 0.0
        %1070 = vmatprep.subr.mxu0 0.0
        %1071 = vmatpush1.xpose.msra.mxu0 0.0
        %1072 = vmatprep.subr.mxu0 0.0
        %1073 = vmatpush1.xpose.msra.mxu0 0.0
        %1074 = vmatprep.subr.mxu0 0.0
        %1075 = vmatpush1.xpose.msra.mxu0 0.0
        %1076 = vmatprep.mubr.f32.mxu0 0.0
        %1077 = vmatmul.mubr.f32.gmra.mrb[0].mxu0 %v1008
        %v1078 = vpop.f32.mrb[0].mxu0
        %v1079 = vadd.f32 0.0, %v1078
        %v1080 = vpop.f32.mrb[0].mxu0
        %1081 = vdwg.mxu0
        %v1082 = vsel %vm843, %v1079, -inf
        %1083 = vmax.xlane.f32.xlu0 %v1082
        %v1084 = vpop.xlane.xlu0 %1083
        %v1085 = vsub.f32 %v1079, %v1084
        %v1086 = vmul.f32 %v1085, 1.442695
        %v1087 = vpow.pop %v1086
        %v1088 = vsel %vm843, %v1087, 0.0
        %1089 = vadd.xlane.f32.xlu0 %v1088
        %v1090 = vpop.xlane.xlu0 %1089
        %v1091 = vrcp.pop %v1090
        %v1092 = vmul.f32 %v1087, %v1091
        %1094 = vrot.lane.b32.xlu0 %v835, 120
        %v1095 = vpop.permute.xlu0 %1094
        %v1098 = vsel %vm843, %v1092, 0
        %1100 = vmatprep.subr.mxu0 0.0
        %1101 = vmatpush1.msra.mxu0 %v1095
        %1102 = vmatprep.subr.mxu0 0.0
        %1103 = vmatpush1.msra.mxu0 0.0
        %1104 = vmatprep.subr.mxu0 0.0
        %1105 = vmatpush1.msra.mxu0 0.0
        %1106 = vmatprep.subr.mxu0 0.0
        %1107 = vmatpush1.msra.mxu0 0.0
        %1108 = vmatprep.subr.mxu0 0.0
        %1109 = vmatpush1.msra.mxu0 0.0
        %1110 = vmatprep.subr.mxu0 0.0
        %1111 = vmatpush1.msra.mxu0 0.0
        %1112 = vmatprep.subr.mxu0 0.0
        %1113 = vmatpush1.msra.mxu0 0.0
        %1114 = vmatprep.subr.mxu0 0.0
        %1115 = vmatpush1.msra.mxu0 0.0
        %1116 = vmatprep.subr.mxu0 0.0
        %1117 = vmatpush1.msra.mxu0 0.0
        %1118 = vmatprep.subr.mxu0 0.0
        %1119 = vmatpush1.msra.mxu0 0.0
        %1120 = vmatprep.subr.mxu0 0.0
        %1121 = vmatpush1.msra.mxu0 0.0
        %1122 = vmatprep.subr.mxu0 0.0
        %1123 = vmatpush1.msra.mxu0 0.0
        %1124 = vmatprep.subr.mxu0 0.0
        %1125 = vmatpush1.msra.mxu0 0.0
        %1126 = vmatprep.subr.mxu0 0.0
        %1127 = vmatpush1.msra.mxu0 0.0
        %1128 = vmatprep.subr.mxu0 0.0
        %1129 = vmatpush1.msra.mxu0 0.0
        %1130 = vmatprep.subr.mxu0 0.0
        %1131 = vmatpush1.msra.mxu0 0.0
        %1132 = vmatprep.subr.mxu0 0.0
        %1133 = vmatpush1.msra.mxu0 0.0
        %1134 = vmatprep.subr.mxu0 0.0
        %1135 = vmatpush1.msra.mxu0 0.0
        %1136 = vmatprep.subr.mxu0 0.0
        %1137 = vmatpush1.msra.mxu0 0.0
        %1138 = vmatprep.subr.mxu0 0.0
        %1139 = vmatpush1.msra.mxu0 0.0
        %1140 = vmatprep.subr.mxu0 0.0
        %1141 = vmatpush1.msra.mxu0 0.0
        %1142 = vmatprep.subr.mxu0 0.0
        %1143 = vmatpush1.msra.mxu0 0.0
        %1144 = vmatprep.subr.mxu0 0.0
        %1145 = vmatpush1.msra.mxu0 0.0
        %1146 = vmatprep.subr.mxu0 0.0
        %1147 = vmatpush1.msra.mxu0 0.0
        %1148 = vmatprep.subr.mxu0 0.0
        %1149 = vmatpush1.msra.mxu0 0.0
        %1150 = vmatprep.subr.mxu0 0.0
        %1151 = vmatpush1.msra.mxu0 0.0
        %1152 = vmatprep.subr.mxu0 0.0
        %1153 = vmatpush1.msra.mxu0 0.0
        %1154 = vmatprep.subr.mxu0 0.0
        %1155 = vmatpush1.msra.mxu0 0.0
        %1156 = vmatprep.subr.mxu0 0.0
        %1157 = vmatpush1.msra.mxu0 0.0
        %1158 = vmatprep.subr.mxu0 0.0
        %1159 = vmatpush1.msra.mxu0 0.0
        %1160 = vmatprep.subr.mxu0 0.0
        %1161 = vmatpush1.msra.mxu0 0.0
        %1162 = vmatprep.subr.mxu0 0.0
        %1163 = vmatpush1.msra.mxu0 0.0
        %1164 = vmatprep.mubr.f32.mxu0 0.0
        %1165 = vmatmul.mubr.f32.gmra.mrb[0].mxu0 %v1098
        %v1166 = vpop.f32.mrb[0].mxu0
        %v1167 = vadd.f32 0.0, %v1166
        %v1168 = vpop.f32.mrb[0].mxu0
        %1169 = vdwg.mxu0
        %1174 = vrot.lane.b32.xlu0 %v838, 120
        %v1175 = vpop.permute.xlu0 %1174
        %1176 = vrot.lane.b32.xlu0 %v839, 120
        %v1177 = vpop.permute.xlu0 %1176
        %1178 = vrot.lane.b32.xlu0 %v840, 120
        %v1179 = vpop.permute.xlu0 %1178
        %1180 = vrot.lane.b32.xlu0 %v841, 120
        %v1181 = vpop.permute.xlu0 %1180
        %v1183 = vsel %vm843, %v1167, 0
        %v1185 = vsel %vm843, %v1175, 0
        %v1187 = vsel %vm843, %v1177, 0
        %v1189 = vsel %vm843, %v1179, 0
        %v1191 = vsel %vm843, %v1181, 0
        %1193 = vmatprep.subr.mxu0 0.0
        %1194 = vmatpush1.xpose.msra.mxu0 %v1185
        %1195 = vmatprep.subr.mxu0 0.0
        %1196 = vmatpush1.xpose.msra.mxu0 %v1187
        %1197 = vmatprep.subr.mxu0 0.0
        %1198 = vmatpush1.xpose.msra.mxu0 %v1189
        %1199 = vmatprep.subr.mxu0 0.0
        %1200 = vmatpush1.xpose.msra.mxu0 %v1191
        %1201 = vmatprep.subr.mxu0 0.0
        %1202 = vmatpush1.xpose.msra.mxu0 0.0
        %1203 = vmatprep.subr.mxu0 0.0
        %1204 = vmatpush1.xpose.msra.mxu0 0.0
        %1205 = vmatprep.subr.mxu0 0.0
        %1206 = vmatpush1.xpose.msra.mxu0 0.0
        %1207 = vmatprep.subr.mxu0 0.0
        %1208 = vmatpush1.xpose.msra.mxu0 0.0
        %1209 = vmatprep.subr.mxu0 0.0
        %1210 = vmatpush1.xpose.msra.mxu0 0.0
        %1211 = vmatprep.subr.mxu0 0.0
        %1212 = vmatpush1.xpose.msra.mxu0 0.0
        %1213 = vmatprep.subr.mxu0 0.0
        %1214 = vmatpush1.xpose.msra.mxu0 0.0
        %1215 = vmatprep.subr.mxu0 0.0
        %1216 = vmatpush1.xpose.msra.mxu0 0.0
        %1217 = vmatprep.subr.mxu0 0.0
        %1218 = vmatpush1.xpose.msra.mxu0 0.0
        %1219 = vmatprep.subr.mxu0 0.0
        %1220 = vmatpush1.xpose.msra.mxu0 0.0
        %1221 = vmatprep.subr.mxu0 0.0
        %1222 = vmatpush1.xpose.msra.mxu0 0.0
        %1223 = vmatprep.subr.mxu0 0.0
        %1224 = vmatpush1.xpose.msra.mxu0 0.0
        %1225 = vmatprep.subr.mxu0 0.0
        %1226 = vmatpush1.xpose.msra.mxu0 0.0
        %1227 = vmatprep.subr.mxu0 0.0
        %1228 = vmatpush1.xpose.msra.mxu0 0.0
        %1229 = vmatprep.subr.mxu0 0.0
        %1230 = vmatpush1.xpose.msra.mxu0 0.0
        %1231 = vmatprep.subr.mxu0 0.0
        %1232 = vmatpush1.xpose.msra.mxu0 0.0
        %1233 = vmatprep.subr.mxu0 0.0
        %1234 = vmatpush1.xpose.msra.mxu0 0.0
        %1235 = vmatprep.subr.mxu0 0.0
        %1236 = vmatpush1.xpose.msra.mxu0 0.0
        %1237 = vmatprep.subr.mxu0 0.0
        %1238 = vmatpush1.xpose.msra.mxu0 0.0
        %1239 = vmatprep.subr.mxu0 0.0
        %1240 = vmatpush1.xpose.msra.mxu0 0.0
        %1241 = vmatprep.subr.mxu0 0.0
        %1242 = vmatpush1.xpose.msra.mxu0 0.0
        %1243 = vmatprep.subr.mxu0 0.0
        %1244 = vmatpush1.xpose.msra.mxu0 0.0
        %1245 = vmatprep.subr.mxu0 0.0
        %1246 = vmatpush1.xpose.msra.mxu0 0.0
        %1247 = vmatprep.subr.mxu0 0.0
        %1248 = vmatpush1.xpose.msra.mxu0 0.0
        %1249 = vmatprep.subr.mxu0 0.0
        %1250 = vmatpush1.xpose.msra.mxu0 0.0
        %1251 = vmatprep.subr.mxu0 0.0
        %1252 = vmatpush1.xpose.msra.mxu0 0.0
        %1253 = vmatprep.subr.mxu0 0.0
        %1254 = vmatpush1.xpose.msra.mxu0 0.0
        %1255 = vmatprep.subr.mxu0 0.0
        %1256 = vmatpush1.xpose.msra.mxu0 0.0
        %1257 = vmatprep.mubr.f32.mxu0 0.0
        %1258 = vmatmul.mubr.f32.gmra.mrb[0].mxu0 %v1183
        %v1259 = vpop.f32.mrb[0].mxu0
        %v1260 = vadd.f32 0.0, %v1259
        %v1261 = vpop.f32.mrb[0].mxu0
        %1262 = vdwg.mxu0
        %v1264 = vsel %vm843, %v1001, 0
        %v1266 = vsel %vm843, %v838, 0
        %v1268 = vsel %vm843, %v839, 0
        %v1270 = vsel %vm843, %v840, 0
        %v1272 = vsel %vm843, %v841, 0
        %1274 = vmatprep.subr.mxu0 0.0
        %1275 = vmatpush1.xpose.msra.mxu0 %v1266
        %1276 = vmatprep.subr.mxu0 0.0
        %1277 = vmatpush1.xpose.msra.mxu0 %v1268
        %1278 = vmatprep.subr.mxu0 0.0
        %1279 = vmatpush1.xpose.msra.mxu0 %v1270
        %1280 = vmatprep.subr.mxu0 0.0
        %1281 = vmatpush1.xpose.msra.mxu0 %v1272
        %1282 = vmatprep.subr.mxu0 0.0
        %1283 = vmatpush1.xpose.msra.mxu0 0.0
        %1284 = vmatprep.subr.mxu0 0.0
        %1285 = vmatpush1.xpose.msra.mxu0 0.0
        %1286 = vmatprep.subr.mxu0 0.0
        %1287 = vmatpush1.xpose.msra.mxu0 0.0
        %1288 = vmatprep.subr.mxu0 0.0
        %1289 = vmatpush1.xpose.msra.mxu0 0.0
        %1290 = vmatprep.subr.mxu0 0.0
        %1291 = vmatpush1.xpose.msra.mxu0 0.0
        %1292 = vmatprep.subr.mxu0 0.0
        %1293 = vmatpush1.xpose.msra.mxu0 0.0
        %1294 = vmatprep.subr.mxu0 0.0
        %1295 = vmatpush1.xpose.msra.mxu0 0.0
        %1296 = vmatprep.subr.mxu0 0.0
        %1297 = vmatpush1.xpose.msra.mxu0 0.0
        %1298 = vmatprep.subr.mxu0 0.0
        %1299 = vmatpush1.xpose.msra.mxu0 0.0
        %1300 = vmatprep.subr.mxu0 0.0
        %1301 = vmatpush1.xpose.msra.mxu0 0.0
        %1302 = vmatprep.subr.mxu0 0.0
        %1303 = vmatpush1.xpose.msra.mxu0 0.0
        %1304 = vmatprep.subr.mxu0 0.0
        %1305 = vmatpush1.xpose.msra.mxu0 0.0
        %1306 = vmatprep.subr.mxu0 0.0
        %1307 = vmatpush1.xpose.msra.mxu0 0.0
        %1308 = vmatprep.subr.mxu0 0.0
        %1309 = vmatpush1.xpose.msra.mxu0 0.0
        %1310 = vmatprep.subr.mxu0 0.0
        %1311 = vmatpush1.xpose.msra.mxu0 0.0
        %1312 = vmatprep.subr.mxu0 0.0
        %1313 = vmatpush1.xpose.msra.mxu0 0.0
        %1314 = vmatprep.subr.mxu0 0.0
        %1315 = vmatpush1.xpose.msra.mxu0 0.0
        %1316 = vmatprep.subr.mxu0 0.0
        %1317 = vmatpush1.xpose.msra.mxu0 0.0
        %1318 = vmatprep.subr.mxu0 0.0
        %1319 = vmatpush1.xpose.msra.mxu0 0.0
        %1320 = vmatprep.subr.mxu0 0.0
        %1321 = vmatpush1.xpose.msra.mxu0 0.0
        %1322 = vmatprep.subr.mxu0 0.0
        %1323 = vmatpush1.xpose.msra.mxu0 0.0
        %1324 = vmatprep.subr.mxu0 0.0
        %1325 = vmatpush1.xpose.msra.mxu0 0.0
        %1326 = vmatprep.subr.mxu0 0.0
        %1327 = vmatpush1.xpose.msra.mxu0 0.0
        %1328 = vmatprep.subr.mxu0 0.0
        %1329 = vmatpush1.xpose.msra.mxu0 0.0
        %1330 = vmatprep.subr.mxu0 0.0
        %1331 = vmatpush1.xpose.msra.mxu0 0.0
        %1332 = vmatprep.subr.mxu0 0.0
        %1333 = vmatpush1.xpose.msra.mxu0 0.0
        %1334 = vmatprep.subr.mxu0 0.0
        %1335 = vmatpush1.xpose.msra.mxu0 0.0
        %1336 = vmatprep.subr.mxu0 0.0
        %1337 = vmatpush1.xpose.msra.mxu0 0.0
        %1338 = vmatprep.mubr.f32.mxu0 0.0
        %1339 = vmatmul.mubr.f32.gmra.mrb[0].mxu0 %v1264
        %v1340 = vpop.f32.mrb[0].mxu0
        %v1341 = vadd.f32 %v1260, %v1340
        %v1342 = vpop.f32.mrb[0].mxu0
        %1343 = vdwg.mxu0
        %1344 = vrot.lane.b32.xlu0 %v842, 112
        %v1345 = vpop.permute.xlu0 %1344
        %1346 = vrot.lane.b32.xlu0 %v739, 112
        %v1347 = vpop.permute.xlu0 %1346
        %v1348 = vsel %vm843, %v1345, 0
        %v1350 = vsel %vm843, %v1347, 0
        %1352 = vmatprep.subr.mxu0 0.0
        %1353 = vmatpush1.xpose.msra.mxu0 %v1350
        %1354 = vmatprep.subr.mxu0 0.0
        %1355 = vmatpush1.xpose.msra.mxu0 0.0
        %1356 = vmatprep.subr.mxu0 0.0
        %1357 = vmatpush1.xpose.msra.mxu0 0.0
        %1358 = vmatprep.subr.mxu0 0.0
        %1359 = vmatpush1.xpose.msra.mxu0 0.0
        %1360 = vmatprep.subr.mxu0 0.0
        %1361 = vmatpush1.xpose.msra.mxu0 0.0
        %1362 = vmatprep.subr.mxu0 0.0
        %1363 = vmatpush1.xpose.msra.mxu0 0.0
        %1364 = vmatprep.subr.mxu0 0.0
        %1365 = vmatpush1.xpose.msra.mxu0 0.0
        %1366 = vmatprep.subr.mxu0 0.0
        %1367 = vmatpush1.xpose.msra.mxu0 0.0
        %1368 = vmatprep.subr.mxu0 0.0
        %1369 = vmatpush1.xpose.msra.mxu0 0.0
        %1370 = vmatprep.subr.mxu0 0.0
        %1371 = vmatpush1.xpose.msra.mxu0 0.0
        %1372 = vmatprep.subr.mxu0 0.0
        %1373 = vmatpush1.xpose.msra.mxu0 0.0
        %1374 = vmatprep.subr.mxu0 0.0
        %1375 = vmatpush1.xpose.msra.mxu0 0.0
        %1376 = vmatprep.subr.mxu0 0.0
        %1377 = vmatpush1.xpose.msra.mxu0 0.0
        %1378 = vmatprep.subr.mxu0 0.0
        %1379 = vmatpush1.xpose.msra.mxu0 0.0
        %1380 = vmatprep.subr.mxu0 0.0
        %1381 = vmatpush1.xpose.msra.mxu0 0.0
        %1382 = vmatprep.subr.mxu0 0.0
        %1383 = vmatpush1.xpose.msra.mxu0 0.0
        %1384 = vmatprep.subr.mxu0 0.0
        %1385 = vmatpush1.xpose.msra.mxu0 0.0
        %1386 = vmatprep.subr.mxu0 0.0
        %1387 = vmatpush1.xpose.msra.mxu0 0.0
        %1388 = vmatprep.subr.mxu0 0.0
        %1389 = vmatpush1.xpose.msra.mxu0 0.0
        %1390 = vmatprep.subr.mxu0 0.0
        %1391 = vmatpush1.xpose.msra.mxu0 0.0
        %1392 = vmatprep.subr.mxu0 0.0
        %1393 = vmatpush1.xpose.msra.mxu0 0.0
        %1394 = vmatprep.subr.mxu0 0.0
        %1395 = vmatpush1.xpose.msra.mxu0 0.0
        %1396 = vmatprep.subr.mxu0 0.0
        %1397 = vmatpush1.xpose.msra.mxu0 0.0
        %1398 = vmatprep.subr.mxu0 0.0
        %1399 = vmatpush1.xpose.msra.mxu0 0.0
        %1400 = vmatprep.subr.mxu0 0.0
        %1401 = vmatpush1.xpose.msra.mxu0 0.0
        %1402 = vmatprep.subr.mxu0 0.0
        %1403 = vmatpush1.xpose.msra.mxu0 0.0
        %1404 = vmatprep.subr.mxu0 0.0
        %1405 = vmatpush1.xpose.msra.mxu0 0.0
        %1406 = vmatprep.subr.mxu0 0.0
        %1407 = vmatpush1.xpose.msra.mxu0 0.0
        %1408 = vmatprep.subr.mxu0 0.0
        %1409 = vmatpush1.xpose.msra.mxu0 0.0
        %1410 = vmatprep.subr.mxu0 0.0
        %1411 = vmatpush1.xpose.msra.mxu0 0.0
        %1412 = vmatprep.subr.mxu0 0.0
        %1413 = vmatpush1.xpose.msra.mxu0 0.0
        %1414 = vmatprep.subr.mxu0 0.0
        %1415 = vmatpush1.xpose.msra.mxu0 0.0
        %1416 = vmatprep.mubr.f32.mxu0 0.0
        %1417 = vmatmul.mubr.f32.gmra.mrb[0].mxu0 %v1348
        %v1418 = vpop.f32.mrb[0].mxu0
        %v1419 = vadd.f32 0.0, %v1418
        %v1420 = vpop.f32.mrb[0].mxu0
        %1421 = vdwg.mxu0
        %v1422 = vsel %vm843, %v1419, -inf
        %1423 = vmax.xlane.f32.xlu0 %v1422
        %v1424 = vpop.xlane.xlu0 %1423
        %v1425 = vsub.f32 %v1419, %v1424
        %v1426 = vmul.f32 %v1425, 1.442695
        %v1427 = vpow.pop %v1426
        %v1428 = vsel %vm843, %v1427, 0.0
        %1429 = vadd.xlane.f32.xlu0 %v1428
        %v1430 = vpop.xlane.xlu0 %1429
        %v1431 = vrcp.pop %v1430
        %v1432 = vmul.f32 %v1427, %v1431
        %1433 = vrot.lane.b32.xlu0 %v835, 112
        %v1434 = vpop.permute.xlu0 %1433
        %v1437 = vsel %vm843, %v1432, 0
        %1439 = vmatprep.subr.mxu0 0.0
        %1440 = vmatpush1.msra.mxu0 %v1434
        %1441 = vmatprep.subr.mxu0 0.0
        %1442 = vmatpush1.msra.mxu0 0.0
        %1443 = vmatprep.subr.mxu0 0.0
        %1444 = vmatpush1.msra.mxu0 0.0
        %1445 = vmatprep.subr.mxu0 0.0
        %1446 = vmatpush1.msra.mxu0 0.0
        %1447 = vmatprep.subr.mxu0 0.0
        %1448 = vmatpush1.msra.mxu0 0.0
        %1449 = vmatprep.subr.mxu0 0.0
        %1450 = vmatpush1.msra.mxu0 0.0
        %1451 = vmatprep.subr.mxu0 0.0
        %1452 = vmatpush1.msra.mxu0 0.0
        %1453 = vmatprep.subr.mxu0 0.0
        %1454 = vmatpush1.msra.mxu0 0.0
        %1455 = vmatprep.subr.mxu0 0.0
        %1456 = vmatpush1.msra.mxu0 0.0
        %1457 = vmatprep.subr.mxu0 0.0
        %1458 = vmatpush1.msra.mxu0 0.0
        %1459 = vmatprep.subr.mxu0 0.0
        %1460 = vmatpush1.msra.mxu0 0.0
        %1461 = vmatprep.subr.mxu0 0.0
        %1462 = vmatpush1.msra.mxu0 0.0
        %1463 = vmatprep.subr.mxu0 0.0
        %1464 = vmatpush1.msra.mxu0 0.0
        %1465 = vmatprep.subr.mxu0 0.0
        %1466 = vmatpush1.msra.mxu0 0.0
        %1467 = vmatprep.subr.mxu0 0.0
        %1468 = vmatpush1.msra.mxu0 0.0
        %1469 = vmatprep.subr.mxu0 0.0
        %1470 = vmatpush1.msra.mxu0 0.0
        %1471 = vmatprep.subr.mxu0 0.0
        %1472 = vmatpush1.msra.mxu0 0.0
        %1473 = vmatprep.subr.mxu0 0.0
        %1474 = vmatpush1.msra.mxu0 0.0
        %1475 = vmatprep.subr.mxu0 0.0
        %1476 = vmatpush1.msra.mxu0 0.0
        %1477 = vmatprep.subr.mxu0 0.0
        %1478 = vmatpush1.msra.mxu0 0.0
        %1479 = vmatprep.subr.mxu0 0.0
        %1480 = vmatpush1.msra.mxu0 0.0
        %1481 = vmatprep.subr.mxu0 0.0
        %1482 = vmatpush1.msra.mxu0 0.0
        %1483 = vmatprep.subr.mxu0 0.0
        %1484 = vmatpush1.msra.mxu0 0.0
        %1485 = vmatprep.subr.mxu0 0.0
        %1486 = vmatpush1.msra.mxu0 0.0
        %1487 = vmatprep.subr.mxu0 0.0
        %1488 = vmatpush1.msra.mxu0 0.0
        %1489 = vmatprep.subr.mxu0 0.0
        %1490 = vmatpush1.msra.mxu0 0.0
        %1491 = vmatprep.subr.mxu0 0.0
        %1492 = vmatpush1.msra.mxu0 0.0
        %1493 = vmatprep.subr.mxu0 0.0
        %1494 = vmatpush1.msra.mxu0 0.0
        %1495 = vmatprep.subr.mxu0 0.0
        %1496 = vmatpush1.msra.mxu0 0.0
        %1497 = vmatprep.subr.mxu0 0.0
        %1498 = vmatpush1.msra.mxu0 0.0
        %1499 = vmatprep.subr.mxu0 0.0
        %1500 = vmatpush1.msra.mxu0 0.0
        %1501 = vmatprep.subr.mxu0 0.0
        %1502 = vmatpush1.msra.mxu0 0.0
        %1503 = vmatprep.mubr.f32.mxu0 0.0
        %1504 = vmatmul.mubr.f32.gmra.mrb[0].mxu0 %v1437
        %v1505 = vpop.f32.mrb[0].mxu0
        %v1506 = vadd.f32 0.0, %v1505
        %v1507 = vpop.f32.mrb[0].mxu0
        %1508 = vdwg.mxu0
        %1509 = vrot.lane.b32.xlu0 %v838, 112
        %v1510 = vpop.permute.xlu0 %1509
        %1511 = vrot.lane.b32.xlu0 %v839, 112
        %v1512 = vpop.permute.xlu0 %1511
        %1513 = vrot.lane.b32.xlu0 %v840, 112
        %v1514 = vpop.permute.xlu0 %1513
        %1515 = vrot.lane.b32.xlu0 %v841, 112
        %v1516 = vpop.permute.xlu0 %1515
        %v1518 = vsel %vm843, %v1506, 0
        %v1520 = vsel %vm843, %v1510, 0
        %v1522 = vsel %vm843, %v1512, 0
        %v1524 = vsel %vm843, %v1514, 0
        %v1526 = vsel %vm843, %v1516, 0
        %1528 = vmatprep.subr.mxu0 0.0
        %1529 = vmatpush1.xpose.msra.mxu0 %v1520
        %1530 = vmatprep.subr.mxu0 0.0
        %1531 = vmatpush1.xpose.msra.mxu0 %v1522
        %1532 = vmatprep.subr.mxu0 0.0
        %1533 = vmatpush1.xpose.msra.mxu0 %v1524
        %1534 = vmatprep.subr.mxu0 0.0
        %1535 = vmatpush1.xpose.msra.mxu0 %v1526
        %1536 = vmatprep.subr.mxu0 0.0
        %1537 = vmatpush1.xpose.msra.mxu0 0.0
        %1538 = vmatprep.subr.mxu0 0.0
        %1539 = vmatpush1.xpose.msra.mxu0 0.0
        %1540 = vmatprep.subr.mxu0 0.0
        %1541 = vmatpush1.xpose.msra.mxu0 0.0
        %1542 = vmatprep.subr.mxu0 0.0
        %1543 = vmatpush1.xpose.msra.mxu0 0.0
        %1544 = vmatprep.subr.mxu0 0.0
        %1545 = vmatpush1.xpose.msra.mxu0 0.0
        %1546 = vmatprep.subr.mxu0 0.0
        %1547 = vmatpush1.xpose.msra.mxu0 0.0
        %1548 = vmatprep.subr.mxu0 0.0
        %1549 = vmatpush1.xpose.msra.mxu0 0.0
        %1550 = vmatprep.subr.mxu0 0.0
        %1551 = vmatpush1.xpose.msra.mxu0 0.0
        %1552 = vmatprep.subr.mxu0 0.0
        %1553 = vmatpush1.xpose.msra.mxu0 0.0
        %1554 = vmatprep.subr.mxu0 0.0
        %1555 = vmatpush1.xpose.msra.mxu0 0.0
        %1556 = vmatprep.subr.mxu0 0.0
        %1557 = vmatpush1.xpose.msra.mxu0 0.0
        %1558 = vmatprep.subr.mxu0 0.0
        %1559 = vmatpush1.xpose.msra.mxu0 0.0
        %1560 = vmatprep.subr.mxu0 0.0
        %1561 = vmatpush1.xpose.msra.mxu0 0.0
        %1562 = vmatprep.subr.mxu0 0.0
        %1563 = vmatpush1.xpose.msra.mxu0 0.0
        %1564 = vmatprep.subr.mxu0 0.0
        %1565 = vmatpush1.xpose.msra.mxu0 0.0
        %1566 = vmatprep.subr.mxu0 0.0
        %1567 = vmatpush1.xpose.msra.mxu0 0.0
        %1568 = vmatprep.subr.mxu0 0.0
        %1569 = vmatpush1.xpose.msra.mxu0 0.0
        %1570 = vmatprep.subr.mxu0 0.0
        %1571 = vmatpush1.xpose.msra.mxu0 0.0
        %1572 = vmatprep.subr.mxu0 0.0
        %1573 = vmatpush1.xpose.msra.mxu0 0.0
        %1574 = vmatprep.subr.mxu0 0.0
        %1575 = vmatpush1.xpose.msra.mxu0 0.0
        %1576 = vmatprep.subr.mxu0 0.0
        %1577 = vmatpush1.xpose.msra.mxu0 0.0
        %1578 = vmatprep.subr.mxu0 0.0
        %1579 = vmatpush1.xpose.msra.mxu0 0.0
        %1580 = vmatprep.subr.mxu0 0.0
        %1581 = vmatpush1.xpose.msra.mxu0 0.0
        %1582 = vmatprep.subr.mxu0 0.0
        %1583 = vmatpush1.xpose.msra.mxu0 0.0
        %1584 = vmatprep.subr.mxu0 0.0
        %1585 = vmatpush1.xpose.msra.mxu0 0.0
        %1586 = vmatprep.subr.mxu0 0.0
        %1587 = vmatpush1.xpose.msra.mxu0 0.0
        %1588 = vmatprep.subr.mxu0 0.0
        %1589 = vmatpush1.xpose.msra.mxu0 0.0
        %1590 = vmatprep.subr.mxu0 0.0
        %1591 = vmatpush1.xpose.msra.mxu0 0.0
        %1592 = vmatprep.mubr.f32.mxu0 0.0
        %1593 = vmatmul.mubr.f32.gmra.mrb[0].mxu0 %v1518
        %v1594 = vpop.f32.mrb[0].mxu0
        %v1595 = vadd.f32 0.0, %v1594
        %v1596 = vpop.f32.mrb[0].mxu0
        %1597 = vdwg.mxu0
        %v1598 = vadd.f32 %v1341, %v1595
        %1599 = vrot.lane.b32.xlu0 %v842, 104
        %v1600 = vpop.permute.xlu0 %1599
        %1601 = vrot.lane.b32.xlu0 %v739, 104
        %v1602 = vpop.permute.xlu0 %1601
        %v1603 = vsel %vm843, %v1600, 0
        %v1605 = vsel %vm843, %v1602, 0
        %1607 = vmatprep.subr.mxu0 0.0
        %1608 = vmatpush1.xpose.msra.mxu0 %v1605
        %1609 = vmatprep.subr.mxu0 0.0
        %1610 = vmatpush1.xpose.msra.mxu0 0.0
        %1611 = vmatprep.subr.mxu0 0.0
        %1612 = vmatpush1.xpose.msra.mxu0 0.0
        %1613 = vmatprep.subr.mxu0 0.0
        %1614 = vmatpush1.xpose.msra.mxu0 0.0
        %1615 = vmatprep.subr.mxu0 0.0
        %1616 = vmatpush1.xpose.msra.mxu0 0.0
        %1617 = vmatprep.subr.mxu0 0.0
        %1618 = vmatpush1.xpose.msra.mxu0 0.0
        %1619 = vmatprep.subr.mxu0 0.0
        %1620 = vmatpush1.xpose.msra.mxu0 0.0
        %1621 = vmatprep.subr.mxu0 0.0
        %1622 = vmatpush1.xpose.msra.mxu0 0.0
        %1623 = vmatprep.subr.mxu0 0.0
        %1624 = vmatpush1.xpose.msra.mxu0 0.0
        %1625 = vmatprep.subr.mxu0 0.0
        %1626 = vmatpush1.xpose.msra.mxu0 0.0
        %1627 = vmatprep.subr.mxu0 0.0
        %1628 = vmatpush1.xpose.msra.mxu0 0.0
        %1629 = vmatprep.subr.mxu0 0.0
        %1630 = vmatpush1.xpose.msra.mxu0 0.0
        %1631 = vmatprep.subr.mxu0 0.0
        %1632 = vmatpush1.xpose.msra.mxu0 0.0
        %1633 = vmatprep.subr.mxu0 0.0
        %1634 = vmatpush1.xpose.msra.mxu0 0.0
        %1635 = vmatprep.subr.mxu0 0.0
        %1636 = vmatpush1.xpose.msra.mxu0 0.0
        %1637 = vmatprep.subr.mxu0 0.0
        %1638 = vmatpush1.xpose.msra.mxu0 0.0
        %1639 = vmatprep.subr.mxu0 0.0
        %1640 = vmatpush1.xpose.msra.mxu0 0.0
        %1641 = vmatprep.subr.mxu0 0.0
        %1642 = vmatpush1.xpose.msra.mxu0 0.0
        %1643 = vmatprep.subr.mxu0 0.0
        %1644 = vmatpush1.xpose.msra.mxu0 0.0
        %1645 = vmatprep.subr.mxu0 0.0
        %1646 = vmatpush1.xpose.msra.mxu0 0.0
        %1647 = vmatprep.subr.mxu0 0.0
        %1648 = vmatpush1.xpose.msra.mxu0 0.0
        %1649 = vmatprep.subr.mxu0 0.0
        %1650 = vmatpush1.xpose.msra.mxu0 0.0
        %1651 = vmatprep.subr.mxu0 0.0
        %1652 = vmatpush1.xpose.msra.mxu0 0.0
        %1653 = vmatprep.subr.mxu0 0.0
        %1654 = vmatpush1.xpose.msra.mxu0 0.0
        %1655 = vmatprep.subr.mxu0 0.0
        %1656 = vmatpush1.xpose.msra.mxu0 0.0
        %1657 = vmatprep.subr.mxu0 0.0
        %1658 = vmatpush1.xpose.msra.mxu0 0.0
        %1659 = vmatprep.subr.mxu0 0.0
        %1660 = vmatpush1.xpose.msra.mxu0 0.0
        %1661 = vmatprep.subr.mxu0 0.0
        %1662 = vmatpush1.xpose.msra.mxu0 0.0
        %1663 = vmatprep.subr.mxu0 0.0
        %1664 = vmatpush1.xpose.msra.mxu0 0.0
        %1665 = vmatprep.subr.mxu0 0.0
        %1666 = vmatpush1.xpose.msra.mxu0 0.0
        %1667 = vmatprep.subr.mxu0 0.0
        %1668 = vmatpush1.xpose.msra.mxu0 0.0
        %1669 = vmatprep.subr.mxu0 0.0
        %1670 = vmatpush1.xpose.msra.mxu0 0.0
        %1671 = vmatprep.mubr.f32.mxu0 0.0
        %1672 = vmatmul.mubr.f32.gmra.mrb[0].mxu0 %v1603
        %v1673 = vpop.f32.mrb[0].mxu0
        %v1674 = vadd.f32 0.0, %v1673
        %v1675 = vpop.f32.mrb[0].mxu0
        %1676 = vdwg.mxu0
        %v1677 = vsel %vm843, %v1674, -inf
        %1678 = vmax.xlane.f32.xlu0 %v1677
        %v1679 = vpop.xlane.xlu0 %1678
        %v1680 = vsub.f32 %v1674, %v1679
        %v1681 = vmul.f32 %v1680, 1.442695
        %v1682 = vpow.pop %v1681
        %v1683 = vsel %vm843, %v1682, 0.0
        %1684 = vadd.xlane.f32.xlu0 %v1683
        %v1685 = vpop.xlane.xlu0 %1684
        %v1686 = vrcp.pop %v1685
        %v1687 = vmul.f32 %v1682, %v1686
        %1688 = vrot.lane.b32.xlu0 %v835, 104
        %v1689 = vpop.permute.xlu0 %1688
        %v1692 = vsel %vm843, %v1687, 0
        %1694 = vmatprep.subr.mxu0 0.0
        %1695 = vmatpush1.msra.mxu0 %v1689
        %1696 = vmatprep.subr.mxu0 0.0
        %1697 = vmatpush1.msra.mxu0 0.0
        %1698 = vmatprep.subr.mxu0 0.0
        %1699 = vmatpush1.msra.mxu0 0.0
        %1700 = vmatprep.subr.mxu0 0.0
        %1701 = vmatpush1.msra.mxu0 0.0
        %1702 = vmatprep.subr.mxu0 0.0
        %1703 = vmatpush1.msra.mxu0 0.0
        %1704 = vmatprep.subr.mxu0 0.0
        %1705 = vmatpush1.msra.mxu0 0.0
        %1706 = vmatprep.subr.mxu0 0.0
        %1707 = vmatpush1.msra.mxu0 0.0
        %1708 = vmatprep.subr.mxu0 0.0
        %1709 = vmatpush1.msra.mxu0 0.0
        %1710 = vmatprep.subr.mxu0 0.0
        %1711 = vmatpush1.msra.mxu0 0.0
        %1712 = vmatprep.subr.mxu0 0.0
        %1713 = vmatpush1.msra.mxu0 0.0
        %1714 = vmatprep.subr.mxu0 0.0
        %1715 = vmatpush1.msra.mxu0 0.0
        %1716 = vmatprep.subr.mxu0 0.0
        %1717 = vmatpush1.msra.mxu0 0.0
        %1718 = vmatprep.subr.mxu0 0.0
        %1719 = vmatpush1.msra.mxu0 0.0
        %1720 = vmatprep.subr.mxu0 0.0
        %1721 = vmatpush1.msra.mxu0 0.0
        %1722 = vmatprep.subr.mxu0 0.0
        %1723 = vmatpush1.msra.mxu0 0.0
        %1724 = vmatprep.subr.mxu0 0.0
        %1725 = vmatpush1.msra.mxu0 0.0
        %1726 = vmatprep.subr.mxu0 0.0
        %1727 = vmatpush1.msra.mxu0 0.0
        %1728 = vmatprep.subr.mxu0 0.0
        %1729 = vmatpush1.msra.mxu0 0.0
        %1730 = vmatprep.subr.mxu0 0.0
        %1731 = vmatpush1.msra.mxu0 0.0
        %1732 = vmatprep.subr.mxu0 0.0
        %1733 = vmatpush1.msra.mxu0 0.0
        %1734 = vmatprep.subr.mxu0 0.0
        %1735 = vmatpush1.msra.mxu0 0.0
        %1736 = vmatprep.subr.mxu0 0.0
        %1737 = vmatpush1.msra.mxu0 0.0
        %1738 = vmatprep.subr.mxu0 0.0
        %1739 = vmatpush1.msra.mxu0 0.0
        %1740 = vmatprep.subr.mxu0 0.0
        %1741 = vmatpush1.msra.mxu0 0.0
        %1742 = vmatprep.subr.mxu0 0.0
        %1743 = vmatpush1.msra.mxu0 0.0
        %1744 = vmatprep.subr.mxu0 0.0
        %1745 = vmatpush1.msra.mxu0 0.0
        %1746 = vmatprep.subr.mxu0 0.0
        %1747 = vmatpush1.msra.mxu0 0.0
        %1748 = vmatprep.subr.mxu0 0.0
        %1749 = vmatpush1.msra.mxu0 0.0
        %1750 = vmatprep.subr.mxu0 0.0
        %1751 = vmatpush1.msra.mxu0 0.0
        %1752 = vmatprep.subr.mxu0 0.0
        %1753 = vmatpush1.msra.mxu0 0.0
        %1754 = vmatprep.subr.mxu0 0.0
        %1755 = vmatpush1.msra.mxu0 0.0
        %1756 = vmatprep.subr.mxu0 0.0
        %1757 = vmatpush1.msra.mxu0 0.0
        %1758 = vmatprep.mubr.f32.mxu0 0.0
        %1759 = vmatmul.mubr.f32.gmra.mrb[0].mxu0 %v1692
        %v1760 = vpop.f32.mrb[0].mxu0
        %v1761 = vadd.f32 0.0, %v1760
        %v1762 = vpop.f32.mrb[0].mxu0
        %1763 = vdwg.mxu0
        %1764 = vrot.lane.b32.xlu0 %v838, 104
        %v1765 = vpop.permute.xlu0 %1764
        %1766 = vrot.lane.b32.xlu0 %v839, 104
        %v1767 = vpop.permute.xlu0 %1766
        %1768 = vrot.lane.b32.xlu0 %v840, 104
        %v1769 = vpop.permute.xlu0 %1768
        %1770 = vrot.lane.b32.xlu0 %v841, 104
        %v1771 = vpop.permute.xlu0 %1770
        %v1773 = vsel %vm843, %v1761, 0
        %v1775 = vsel %vm843, %v1765, 0
        %v1777 = vsel %vm843, %v1767, 0
        %v1779 = vsel %vm843, %v1769, 0
        %v1781 = vsel %vm843, %v1771, 0
        %1783 = vmatprep.subr.mxu0 0.0
        %1784 = vmatpush1.xpose.msra.mxu0 %v1775
        %1785 = vmatprep.subr.mxu0 0.0
        %1786 = vmatpush1.xpose.msra.mxu0 %v1777
        %1787 = vmatprep.subr.mxu0 0.0
        %1788 = vmatpush1.xpose.msra.mxu0 %v1779
        %1789 = vmatprep.subr.mxu0 0.0
        %1790 = vmatpush1.xpose.msra.mxu0 %v1781
        %1791 = vmatprep.subr.mxu0 0.0
        %1792 = vmatpush1.xpose.msra.mxu0 0.0
        %1793 = vmatprep.subr.mxu0 0.0
        %1794 = vmatpush1.xpose.msra.mxu0 0.0
        %1795 = vmatprep.subr.mxu0 0.0
        %1796 = vmatpush1.xpose.msra.mxu0 0.0
        %1797 = vmatprep.subr.mxu0 0.0
        %1798 = vmatpush1.xpose.msra.mxu0 0.0
        %1799 = vmatprep.subr.mxu0 0.0
        %1800 = vmatpush1.xpose.msra.mxu0 0.0
        %1801 = vmatprep.subr.mxu0 0.0
        %1802 = vmatpush1.xpose.msra.mxu0 0.0
        %1803 = vmatprep.subr.mxu0 0.0
        %1804 = vmatpush1.xpose.msra.mxu0 0.0
        %1805 = vmatprep.subr.mxu0 0.0
        %1806 = vmatpush1.xpose.msra.mxu0 0.0
        %1807 = vmatprep.subr.mxu0 0.0
        %1808 = vmatpush1.xpose.msra.mxu0 0.0
        %1809 = vmatprep.subr.mxu0 0.0
        %1810 = vmatpush1.xpose.msra.mxu0 0.0
        %1811 = vmatprep.subr.mxu0 0.0
        %1812 = vmatpush1.xpose.msra.mxu0 0.0
        %1813 = vmatprep.subr.mxu0 0.0
        %1814 = vmatpush1.xpose.msra.mxu0 0.0
        %1815 = vmatprep.subr.mxu0 0.0
        %1816 = vmatpush1.xpose.msra.mxu0 0.0
        %1817 = vmatprep.subr.mxu0 0.0
        %1818 = vmatpush1.xpose.msra.mxu0 0.0
        %1819 = vmatprep.subr.mxu0 0.0
        %1820 = vmatpush1.xpose.msra.mxu0 0.0
        %1821 = vmatprep.subr.mxu0 0.0
        %1822 = vmatpush1.xpose.msra.mxu0 0.0
        %1823 = vmatprep.subr.mxu0 0.0
        %1824 = vmatpush1.xpose.msra.mxu0 0.0
        %1825 = vmatprep.subr.mxu0 0.0
        %1826 = vmatpush1.xpose.msra.mxu0 0.0
        %1827 = vmatprep.subr.mxu0 0.0
        %1828 = vmatpush1.xpose.msra.mxu0 0.0
        %1829 = vmatprep.subr.mxu0 0.0
        %1830 = vmatpush1.xpose.msra.mxu0 0.0
        %1831 = vmatprep.subr.mxu0 0.0
        %1832 = vmatpush1.xpose.msra.mxu0 0.0
        %1833 = vmatprep.subr.mxu0 0.0
        %1834 = vmatpush1.xpose.msra.mxu0 0.0
        %1835 = vmatprep.subr.mxu0 0.0
        %1836 = vmatpush1.xpose.msra.mxu0 0.0
        %1837 = vmatprep.subr.mxu0 0.0
        %1838 = vmatpush1.xpose.msra.mxu0 0.0
        %1839 = vmatprep.subr.mxu0 0.0
        %1840 = vmatpush1.xpose.msra.mxu0 0.0
        %1841 = vmatprep.subr.mxu0 0.0
        %1842 = vmatpush1.xpose.msra.mxu0 0.0
        %1843 = vmatprep.subr.mxu0 0.0
        %1844 = vmatpush1.xpose.msra.mxu0 0.0
        %1845 = vmatprep.subr.mxu0 0.0
        %1846 = vmatpush1.xpose.msra.mxu0 0.0
        %1847 = vmatprep.mubr.f32.mxu0 0.0
        %1848 = vmatmul.mubr.f32.gmra.mrb[0].mxu0 %v1773
        %v1849 = vpop.f32.mrb[0].mxu0
        %v1850 = vadd.f32 0.0, %v1849
        %v1851 = vpop.f32.mrb[0].mxu0
        %1852 = vdwg.mxu0
        %v1853 = vadd.f32 %v1598, %v1850
        %v1854 = vld [vmem:[%s10] sm:$0x1]
        %v1856 = vlaneseq
        %v1857 = vshrl.u32 %v1856, 7
        %v1858 = vsub.s32 0, %v1857
        %v1859 = vrot.slane %v1854, %v1858
        %v1861 = vadd.f32 %v1853, %v1859
        %1862 = vst.msk [vmem:[%s545] sm:$0xff] %vm560, %v1861
        %s1863 = sand.u32 %s303, 1
        %s1864 = scalar_lea.sflag [#allocation4], %s1863
        %s1865 = sand.u32 %s303, 1
        %s1866 = smul.addr %s1865, 8
        %s1867 = scalar_lea.vmem [#allocation14], %s1866
        // Predicated region
        $region93: #{tpu_custom_call.1} parent=63 // pred_check
          %p1868 = pneg %p313
        $region94: #{tpu_custom_call.1} parent=63 // pred_check_branch
          %1870 = sbr.rel (%p1868) target = $region96
        $region95: #{tpu_custom_call.1} parent=63 // pred_region
          %s1872 = ssub.s32 128, 128
          %1873 = vsyncadd %s1864, %s1872
          %s1874 = sadd.s32 %s38, %s37
          %s1875 = smul.addr %s1874, 128
          %s1876 = scalar_lea.hbm %s11, %s1875
          %s1878 = sshll.u32 %s1867, 4
          %s1879 = int_to_ptr.vmem [resolvable:$true] %s1878
          %1881 = dma.vmem_to_hbm [thread:$0]  %s1879, 128, %s1876, %s1864
        $region96: #{tpu_custom_call.1} parent=63 // pred_fallthru
          _
      $region64: #{tpu_custom_call.1} parent=5 // pred_fallthru
        _
      %p1882 = scmp.le.s32.totalorder 2, %s28
      // Predicated region
      $region97: #{tpu_custom_call.1} parent=5 // pred_check
        %p1883 = pneg %p1882
      $region98: #{tpu_custom_call.1} parent=5 // pred_check_branch
        %1885 = sbr.rel (%p1883) target = $region100
      $region99: #{tpu_custom_call.1} parent=5 // pred_region
        %s1886 = ssub.s32 %s28, 2
        // Predicated region
        $region101: #{tpu_custom_call.1} parent=99 // pred_check
          %p1887 = pneg %p319
        $region102: #{tpu_custom_call.1} parent=99 // pred_check_branch
          %1889 = sbr.rel (%p1887) target = $region104
        $region103: #{tpu_custom_call.1} parent=99 // pred_region
          %s1890 = sand.u32 %s304, 1
          %s1891 = scalar_lea.sflag [#allocation4], %s1890
          %s1892 = sand.u32 %s304, 1
          %s1893 = smul.addr %s1892, 8
          %s1894 = scalar_lea.vmem [#allocation14], %s1893
          %1895 = dma.done %s1891, 128
        $region104: #{tpu_custom_call.1} parent=99 // pred_fallthru
          _
      $region100: #{tpu_custom_call.1} parent=5 // pred_fallthru
        _
    $region6: #{tpu_custom_call.1} parent=1 // loop_footer
      %s32 = sadd.s32 1, %s28
    $region7: #{tpu_custom_call.1} parent=1 // loop_footer_branch
      %27 = sbr.rel target = $region3
    $region8: #{tpu_custom_call.1} parent=1 // loop_exit
      _
    %1896 = vsyncpa [#allocation3], 1
    %s1897 = scalar_lea.sflag [#allocation3], 1
    %1898 = vsyncpa %s1897, 1
    %1899 = vsyncpa [#allocation6], 1
    %s1900 = scalar_lea.sflag [#allocation6], 1
    %1901 = vsyncpa %s1900, 1
    %1902 = vsyncpa [#allocation9], 1
    %1903 = vsyncpa [#allocation12], 1
    %1904 = vsyncpa [#allocation4], 1
    %s1905 = scalar_lea.sflag [#allocation4], 1
    %1906 = vsyncpa %s1905, 1

</llo_original>
